<compile_context>
chip_gen: v7x
topology: tpu7x:2x2x1
jax: 0.10.0
libtpu: 0.0.40
codegen_flags: <defaults>
</compile_context>

<pallas_src>
import functools

import jax
import jax.numpy as jnp
from jax.experimental import pallas as pl
from jax.experimental.pallas import tpu as pltpu

PROJ_DIM = 64  # hidden width of the scoring MLP: Linear(H, 64) -> ReLU -> Linear(64, 1)


def _round_up(x, m):
    return (x + m - 1) // m * m


def self_attention_kernel(x_ref, w1_ref, b1_ref, w2_ref, out_ref, wts_ref, *, seq_len):
    TB, Tp, Hp = x_ref.shape
    x = x_ref[...]                  # (TB, Tp, Hp) f32 (zero-padded along T / H)
    w1 = w1_ref[...]                # (Hp, 64)  (zero-padded rows for padded H)
    b1 = b1_ref[...]                # (1, 64)
    w2 = w2_ref[...]                # (1, 64)   (Linear(64,1) weight, transposed)

    # ---- scoring MLP: one 2-D matmul over all TB*Tp rows (good MXU row fill) ----
    h = jnp.dot(x.reshape(TB * Tp, Hp), w1, preferred_element_type=jnp.float32)
    h = jnp.maximum(h + b1, 0.0)                                   # ReLU, (TB*Tp, 64)

    # Linear(64, 1): VPU multiply + lane reduce instead of an N=1 MXU matmul.
    energy = jnp.sum(h.reshape(TB, Tp, PROJ_DIM) * w2, axis=-1)    # (TB, Tp)
    # NOTE: the final scalar bias b2 is intentionally NOT added: softmax over T is
    # shift-invariant, so it has no effect on weights or the pooled output.

    # Mask padded sequence positions (x was zero-padded along T in the wrapper).
    if Tp != seq_len:
        t_idx = jax.lax.broadcasted_iota(jnp.int32, (TB, Tp), 1)
        energy = jnp.where(t_idx < seq_len, energy, -jnp.inf)

    # ---- softmax over the sequence axis (lane axis; Tp % 128 == 0 => full vregs) ----
    m = jnp.max(energy, axis=1, keepdims=True)
    p = jnp.exp(energy - m)
    denom = jnp.sum(p, axis=1, keepdims=True)
    # EUP vrcp (otherwise-idle slot) + one Newton step -> full f32-accurate reciprocal.
    inv = pl.reciprocal(denom, approx=True)
    inv = inv * (2.0 - denom * inv)
    weights = p * inv                                              # (TB, Tp)

    # ---- weighted sum over T, reusing the already-resident x tile (VPU + reduce) ----
    pooled = jnp.sum(x * weights[:, :, None], axis=1)              # (TB, Hp)

    out_ref[...] = pooled.astype(out_ref.dtype)
    wts_ref[...] = weights.astype(wts_ref.dtype)


def self_attention(x, w1, b1, w2, b2, *, block_b=8):
    """x: (B, T, H) f32. Returns (pooled (B, H), weights (B, T)).

    block_b: batch rows per grid step (keep it a multiple of 8). Choose it so that
    2 * block_b * Tp * Hp * 4 bytes stays well under the scoped VMEM limit
    (~32 MiB; on v7x the TensorCore only has 64 MiB physical VMEM, so use roughly
    half the block_b you would pick for v5e/v6e).
    """
    B, T, H = x.shape
    del b2  # scalar shift cancels in the softmax; no effect on either output.

    Bp = _round_up(B, block_b)
    Tp = _round_up(T, 128)   # lane-dense weights output + full-vreg softmax reductions
    Hp = _round_up(H, 128)   # lane-dense pooled output + aligned MXU contraction dim

    x_p = jnp.pad(x, ((0, Bp - B), (0, Tp - T), (0, Hp - H)))
    w1_p = jnp.pad(w1, ((0, Hp - H), (0, 0)))
    w2_row = jnp.reshape(w2, (1, PROJ_DIM))

    kernel = functools.partial(self_attention_kernel, seq_len=T)

    pooled_p, weights_p = pl.pallas_call(
        kernel,
        out_shape=(
            jax.ShapeDtypeStruct((Bp, Hp), x.dtype),
            jax.ShapeDtypeStruct((Bp, Tp), x.dtype),
        ),
        grid=(Bp // block_b,),
        in_specs=[
            pl.BlockSpec((block_b, Tp, Hp), lambda i: (i, 0, 0)),
            pl.BlockSpec((Hp, PROJ_DIM), lambda i: (0, 0)),
            pl.BlockSpec((1, PROJ_DIM), lambda i: (0, 0)),
            pl.BlockSpec((1, PROJ_DIM), lambda i: (0, 0)),
        ],
        out_specs=(
            pl.BlockSpec((block_b, Hp), lambda i: (i, 0)),
            pl.BlockSpec((block_b, Tp), lambda i: (i, 0)),
        ),
        compiler_params=pltpu.CompilerParams(
            # Batch grid axis is independent -> shard across TensorCores on v7x.
            dimension_semantics=("parallel",),
        ),
    )(x_p, w1_p, b1, w2_row)

    return pooled_p[:B, :H], weights_p[:B, :T]


def reference(x, w1, b1, w2, b2):
    h = jnp.maximum(x @ w1 + b1, 0.0)
    energy = (h @ w2)[..., 0] + b2[0, 0]
    weights = jax.nn.softmax(energy, axis=1)
    pooled = jnp.sum(x * weights[..., None], axis=1)
    return pooled, weights


if __name__ == "__main__":
    B, T, H = 2, 8, 32  # batch, seq, hidden_dim

    key = jax.random.PRNGKey(0)
    kx, kw1, kb1, kw2, kb2 = jax.random.split(key, 5)

    x = jax.random.normal(kx, (B, T, H), dtype=jnp.float32)
    # Parameter shapes match nn.Linear(H, 64) and nn.Linear(64, 1).
    w1 = jax.random.normal(kw1, (H, 64), dtype=jnp.float32) * 0.1
    b1 = jax.random.normal(kb1, (1, 64), dtype=jnp.float32) * 0.1
    w2 = jax.random.normal(kw2, (64, 1), dtype=jnp.float32) * 0.1
    b2 = jax.random.normal(kb2, (1, 1), dtype=jnp.float32) * 0.1

    pooled, weights = self_attention(x, w1, b1, w2, b2)
    jax.block_until_ready((pooled, weights))

    pooled_ref, weights_ref = reference(x, w1, b1, w2, b2)
    assert pooled.shape == (B, H) and weights.shape == (B, T)
    assert jnp.allclose(pooled, pooled_ref, atol=1e-5, rtol=1e-5)
    assert jnp.allclose(weights, weights_ref, atol=1e-5, rtol=1e-5)

    print("KERNEL_OK")
</pallas_src>

<mosaic_0001>
module attributes {stable_mosaic.version = 11 : i64} {
  func.func @self_attention_kernel(%arg0: i32, %arg1: memref<8x128x128xf32, #tpu.memory_space<vmem>>, %arg2: memref<128x64xf32, #tpu.memory_space<vmem>>, %arg3: memref<1x64xf32, #tpu.memory_space<vmem>>, %arg4: memref<1x64xf32, #tpu.memory_space<vmem>>, %arg5: memref<8x128xf32, #tpu.memory_space<vmem>>, %arg6: memref<8x128xf32, #tpu.memory_space<vmem>>) attributes {dimension_semantics = [#tpu.dimension_semantics<parallel>], iteration_bounds = array<i64: 1>, scalar_prefetch = 0 : i64, scratch_operands = 0 : i64, tpu.core_type = #tpu.core_type<tc>, window_params = [{transform_indices = @transform_0, window_bounds = array<i64: 8, 128, 128>}, {pipeline_mode = #tpu.pipeline_mode<synchronous>, transform_indices = @transform_1, window_bounds = array<i64: 128, 64>}, {pipeline_mode = #tpu.pipeline_mode<synchronous>, transform_indices = @transform_2, window_bounds = array<i64: 1, 64>}, {pipeline_mode = #tpu.pipeline_mode<synchronous>, transform_indices = @transform_3, window_bounds = array<i64: 1, 64>}, {transform_indices = @transform_4, window_bounds = array<i64: 8, 128>}, {transform_indices = @transform_5, window_bounds = array<i64: 8, 128>}]} {
    %c0 = arith.constant 0 : index
    %c0_0 = arith.constant 0 : index
    %c0_1 = arith.constant 0 : index
    %0 = vector.load %arg1[%c0, %c0_0, %c0_1] : memref<8x128x128xf32, #tpu.memory_space<vmem>>, vector<8x128x128xf32>
    %c0_2 = arith.constant 0 : index
    %c0_3 = arith.constant 0 : index
    %1 = vector.load %arg2[%c0_2, %c0_3] : memref<128x64xf32, #tpu.memory_space<vmem>>, vector<128x64xf32>
    %c0_4 = arith.constant 0 : index
    %c0_5 = arith.constant 0 : index
    %2 = vector.load %arg3[%c0_4, %c0_5] : memref<1x64xf32, #tpu.memory_space<vmem>>, vector<1x64xf32>
    %c0_6 = arith.constant 0 : index
    %c0_7 = arith.constant 0 : index
    %3 = vector.load %arg4[%c0_6, %c0_7] : memref<1x64xf32, #tpu.memory_space<vmem>>, vector<1x64xf32>
    %4 = vector.shape_cast %0 : vector<8x128x128xf32> to vector<1024x128xf32>
    %cst = arith.constant dense<0.000000e+00> : vector<1024x64xf32>
    %5 = tpu.matmul %4, %1, %cst {dimension_numbers = #tpu.dot_dimension_numbers<[1], [0], [0], [1], [0, 0, 1, 1], [], []>} : vector<1024x128xf32>, vector<128x64xf32>, vector<1024x64xf32> -> vector<1024x64xf32>
    %6 = vector.broadcast %2 : vector<1x64xf32> to vector<1024x64xf32>
    %7 = arith.addf %5, %6 : vector<1024x64xf32>
    %cst_8 = arith.constant 0.000000e+00 : f32
    %8 = vector.broadcast %cst_8 : f32 to vector<1024x64xf32>
    %9 = arith.maximumf %7, %8 : vector<1024x64xf32>
    %10 = vector.shape_cast %9 : vector<1024x64xf32> to vector<8x128x64xf32>
    %11 = vector.shape_cast %3 : vector<1x64xf32> to vector<1x1x64xf32>
    %12 = vector.broadcast %11 : vector<1x1x64xf32> to vector<8x128x64xf32>
    %13 = arith.mulf %10, %12 : vector<8x128x64xf32>
    %cst_9 = arith.constant dense<0.000000e+00> : vector<8x128xf32>
    %14 = vector.multi_reduction <add>, %13, %cst_9 [2] : vector<8x128x64xf32> to vector<8x128xf32>
    %15 = tpu.iota {dimensions = array<i32: 1>} : vector<8x128xi32>
    %c8_i32 = arith.constant 8 : i32
    %16 = vector.broadcast %c8_i32 : i32 to vector<8x128xi32>
    %17 = arith.cmpi slt, %15, %16 : vector<8x128xi32>
    %cst_10 = arith.constant 0xFF800000 : f32
    %18 = vector.broadcast %cst_10 : f32 to vector<8x128xf32>
    %19 = arith.select %17, %14, %18 : vector<8x128xi1>, vector<8x128xf32>
    %cst_11 = arith.constant dense<0xFF800000> : vector<8xf32>
    %20 = vector.multi_reduction <maximumf>, %19, %cst_11 [1] : vector<8x128xf32> to vector<8xf32>
    %21 = vector.shape_cast %20 : vector<8xf32> to vector<8x1xf32>
    %22 = vector.broadcast %21 : vector<8x1xf32> to vector<8x128xf32>
    %23 = arith.subf %19, %22 : vector<8x128xf32>
    %24 = math.exp %23 : vector<8x128xf32>
    %cst_12 = arith.constant dense<0.000000e+00> : vector<8xf32>
    %25 = vector.multi_reduction <add>, %24, %cst_12 [1] : vector<8x128xf32> to vector<8xf32>
    %26 = vector.shape_cast %25 : vector<8xf32> to vector<8x1xf32>
    %27 = tpu.reciprocal %26 {approx = true} : vector<8x1xf32> -> vector<8x1xf32>
    %28 = arith.mulf %26, %27 : vector<8x1xf32>
    %cst_13 = arith.constant 2.000000e+00 : f32
    %29 = vector.broadcast %cst_13 : f32 to vector<8x1xf32>
    %30 = arith.subf %29, %28 : vector<8x1xf32>
    %31 = arith.mulf %27, %30 : vector<8x1xf32>
    %32 = vector.broadcast %31 : vector<8x1xf32> to vector<8x128xf32>
    %33 = arith.mulf %24, %32 : vector<8x128xf32>
    %34 = vector.shape_cast %33 : vector<8x128xf32> to vector<8x128x1xf32>
    %35 = vector.broadcast %34 : vector<8x128x1xf32> to vector<8x128x128xf32>
    %36 = arith.mulf %0, %35 : vector<8x128x128xf32>
    %cst_14 = arith.constant dense<0.000000e+00> : vector<8x128xf32>
    %37 = vector.multi_reduction <add>, %36, %cst_14 [1] : vector<8x128x128xf32> to vector<8x128xf32>
    %c0_15 = arith.constant 0 : index
    %c0_16 = arith.constant 0 : index
    %38 = vector.load %arg5[%c0_15, %c0_16] : memref<8x128xf32, #tpu.memory_space<vmem>>, vector<8x128xf32>
    tpu.vector_store %arg5[%c0_15, %c0_16], %37 {strides = array<i32>} : memref<8x128xf32, #tpu.memory_space<vmem>>, vector<8x128xf32>,
    %c0_17 = arith.constant 0 : index
    %c0_18 = arith.constant 0 : index
    %39 = vector.load %arg6[%c0_17, %c0_18] : memref<8x128xf32, #tpu.memory_space<vmem>>, vector<8x128xf32>
    tpu.vector_store %arg6[%c0_17, %c0_18], %33 {strides = array<i32>} : memref<8x128xf32, #tpu.memory_space<vmem>>, vector<8x128xf32>,
    return
  }
  func.func @transform_0(%arg0: i32) -> (i32, i32, i32) {
    %c0_i32 = arith.constant 0 : i32
    %c0_i32_0 = arith.constant 0 : i32
    %c0_i32_1 = arith.constant 0 : i32
    return %arg0, %c0_i32, %c0_i32_0 : i32, i32, i32
  }
  func.func @transform_1(%arg0: i32) -> (i32, i32) {
    %c0_i32 = arith.constant 0 : i32
    %c0_i32_0 = arith.constant 0 : i32
    %c0_i32_1 = arith.constant 0 : i32
    return %c0_i32, %c0_i32_0 : i32, i32
  }
  func.func @transform_2(%arg0: i32) -> (i32, i32) {
    %c0_i32 = arith.constant 0 : i32
    %c0_i32_0 = arith.constant 0 : i32
    %c0_i32_1 = arith.constant 0 : i32
    return %c0_i32, %c0_i32_0 : i32, i32
  }
  func.func @transform_3(%arg0: i32) -> (i32, i32) {
    %c0_i32 = arith.constant 0 : i32
    %c0_i32_0 = arith.constant 0 : i32
    %c0_i32_1 = arith.constant 0 : i32
    return %c0_i32, %c0_i32_0 : i32, i32
  }
  func.func @transform_4(%arg0: i32) -> (i32, i32) {
    %c0_i32 = arith.constant 0 : i32
    %c0_i32_0 = arith.constant 0 : i32
    return %arg0, %c0_i32 : i32, i32
  }
  func.func @transform_5(%arg0: i32) -> (i32, i32) {
    %c0_i32 = arith.constant 0 : i32
    %c0_i32_0 = arith.constant 0 : i32
    return %arg0, %c0_i32 : i32, i32
  }
}

</mosaic_0001>

<llo_original>
// kernel: tpu_custom_call.1
$region0: #{tpu_custom_call.1}
  #allocation0 [shape = 'u32[]', space=smem, size = 0x4, offset = 0x4, fixed_abs, tag = 'smem constant byte address 0x4 - core index']
  #allocation1 [shape = 'u32[144,128]{1,0:T(1,128)}', space=vmem, size = 0x12000, scoped, tag = 'internal scratch']
  %s0 = inlined_call_operand.hbm [shape: f32[8,128,128], index: 0, kind: input, shape index: {}]
  %s1 = inlined_call_operand.vmem [shape: f32[128,64], index: 1, kind: input, shape index: {}]
  %s2 = inlined_call_operand.vmem [shape: f32[1,64], index: 2, kind: input, shape index: {}]
  %s3 = inlined_call_operand.vmem [shape: f32[1,64], index: 3, kind: input, shape index: {}]
  %s4 = inlined_call_operand.hbm [shape: f32[8,128], index: 4, kind: output, shape index: {0}]
  %s5 = inlined_call_operand.hbm [shape: f32[8,128], index: 5, kind: output, shape index: {1}]
  %6 = xla_tuple %s4, %s5
  %s7 = sld [smem:[#allocation0]]
  $region38: #{tpu_custom_call.1} parent=0
    _
  %s9 = ssub.s32 1, %s7
  %s10 = scalar_select 0, %s9, %s7
  $region1: #{tpu_custom_call.1} parent=0
    #allocation2 [shape = 'u8[524288]{0}', space=vmem, size = 0x80000, scoped, tag = 'input window, operand 0, single buffered']
    #allocation3 [shape = 's32[1]{0}', space=sflag, size = 0x4, scoped, tag = 'scoped memory for tpu_custom_call.1']
    #allocation4 [shape = 's32[1]{0}', space=sflag, size = 0x4, scoped, tag = 'scoped memory for tpu_custom_call.1']
    #allocation5 [shape = 'u8[4096]{0}', space=vmem, size = 0x1000, scoped, tag = 'output window, operand 0, single buffered']
    #allocation6 [shape = 'u8[4096]{0}', space=vmem, size = 0x1000, scoped, tag = 'output window, operand 1, single buffered']
    #allocation7 [shape = 's32[1]{0}', space=sflag, size = 0x4, scoped, tag = 'scoped memory for tpu_custom_call.1']
    %11 = vsyncpa [#allocation3], 0
    %12 = vsyncpa [#allocation4], 0
    %13 = vsyncpa [#allocation7], 0
    // Predicated region
    $region2: #{tpu_custom_call.1} parent=1 // pred_check
      _
    $region3: #{tpu_custom_call.1} parent=1 // pred_check_branch
      %15 = sbr.rel (0) target = $region5
    $region4: #{tpu_custom_call.1} parent=1 // pred_region
      %s17 = ssub.s32 16384, 16384
      %18 = vsyncadd [#allocation3], %s17
      %s19 = sshll.u32 [#allocation2], 4
      %s20 = int_to_ptr.vmem [resolvable:$true] %s19
      %25 = dma.hbm_to_vmem [thread:$0]  %s0, 16384, %s20, [#allocation3], 128, 128, 8
    $region5: #{tpu_custom_call.1} parent=1 // pred_fallthru
      _
    // Predicated region
    $region6: #{tpu_custom_call.1} parent=1 // pred_check
      _
    $region7: #{tpu_custom_call.1} parent=1 // pred_check_branch
      %27 = sbr.rel (0) target = $region9
    $region8: #{tpu_custom_call.1} parent=1 // pred_region
      _
    $region9: #{tpu_custom_call.1} parent=1 // pred_fallthru
      _
    // Predicated region
    $region10: #{tpu_custom_call.1} parent=1 // pred_check
      _
    $region11: #{tpu_custom_call.1} parent=1 // pred_check_branch
      %29 = sbr.rel (0) target = $region13
    $region12: #{tpu_custom_call.1} parent=1 // pred_region
      _
    $region13: #{tpu_custom_call.1} parent=1 // pred_fallthru
      _
    // Predicated region
    $region14: #{tpu_custom_call.1} parent=1 // pred_check
      _
    $region15: #{tpu_custom_call.1} parent=1 // pred_check_branch
      %31 = sbr.rel (0) target = $region17
    $region16: #{tpu_custom_call.1} parent=1 // pred_region
      _
    $region17: #{tpu_custom_call.1} parent=1 // pred_fallthru
      _
    // Predicated region
    $region18: #{tpu_custom_call.1} parent=1 // pred_check
      _
    $region19: #{tpu_custom_call.1} parent=1 // pred_check_branch
      %33 = sbr.rel (0) target = $region21
    $region20: #{tpu_custom_call.1} parent=1 // pred_region
      %34 = dma.done [#allocation3], 16384
    $region21: #{tpu_custom_call.1} parent=1 // pred_fallthru
      _
    %v35 = vld [vmem:[#allocation2] sm:$0xff]
    %v36 = vld [vmem:[#allocation2 + $0x8] sm:$0xff]
    %v37 = vld [vmem:[#allocation2 + $0x10] sm:$0xff]
    %v38 = vld [vmem:[#allocation2 + $0x18] sm:$0xff]
    %v39 = vld [vmem:[#allocation2 + $0x20] sm:$0xff]
    %v40 = vld [vmem:[#allocation2 + $0x28] sm:$0xff]
    %v41 = vld [vmem:[#allocation2 + $0x30] sm:$0xff]
    %v42 = vld [vmem:[#allocation2 + $0x38] sm:$0xff]
    %v43 = vld [vmem:[#allocation2 + $0x40] sm:$0xff]
    %v44 = vld [vmem:[#allocation2 + $0x48] sm:$0xff]
    %v45 = vld [vmem:[#allocation2 + $0x50] sm:$0xff]
    %v46 = vld [vmem:[#allocation2 + $0x58] sm:$0xff]
    %v47 = vld [vmem:[#allocation2 + $0x60] sm:$0xff]
    %v48 = vld [vmem:[#allocation2 + $0x68] sm:$0xff]
    %v49 = vld [vmem:[#allocation2 + $0x70] sm:$0xff]
    %v50 = vld [vmem:[#allocation2 + $0x78] sm:$0xff]
    %v51 = vld [vmem:[#allocation2 + $0x80] sm:$0xff]
    %v52 = vld [vmem:[#allocation2 + $0x88] sm:$0xff]
    %v53 = vld [vmem:[#allocation2 + $0x90] sm:$0xff]
    %v54 = vld [vmem:[#allocation2 + $0x98] sm:$0xff]
    %v55 = vld [vmem:[#allocation2 + $0xa0] sm:$0xff]
    %v56 = vld [vmem:[#allocation2 + $0xa8] sm:$0xff]
    %v57 = vld [vmem:[#allocation2 + $0xb0] sm:$0xff]
    %v58 = vld [vmem:[#allocation2 + $0xb8] sm:$0xff]
    %v59 = vld [vmem:[#allocation2 + $0xc0] sm:$0xff]
    %v60 = vld [vmem:[#allocation2 + $0xc8] sm:$0xff]
    %v61 = vld [vmem:[#allocation2 + $0xd0] sm:$0xff]
    %v62 = vld [vmem:[#allocation2 + $0xd8] sm:$0xff]
    %v63 = vld [vmem:[#allocation2 + $0xe0] sm:$0xff]
    %v64 = vld [vmem:[#allocation2 + $0xe8] sm:$0xff]
    %v65 = vld [vmem:[#allocation2 + $0xf0] sm:$0xff]
    %v66 = vld [vmem:[#allocation2 + $0xf8] sm:$0xff]
    %v67 = vld [vmem:[#allocation2 + $0x100] sm:$0xff]
    %v68 = vld [vmem:[#allocation2 + $0x108] sm:$0xff]
    %v69 = vld [vmem:[#allocation2 + $0x110] sm:$0xff]
    %v70 = vld [vmem:[#allocation2 + $0x118] sm:$0xff]
    %v71 = vld [vmem:[#allocation2 + $0x120] sm:$0xff]
    %v72 = vld [vmem:[#allocation2 + $0x128] sm:$0xff]
    %v73 = vld [vmem:[#allocation2 + $0x130] sm:$0xff]
    %v74 = vld [vmem:[#allocation2 + $0x138] sm:$0xff]
    %v75 = vld [vmem:[#allocation2 + $0x140] sm:$0xff]
    %v76 = vld [vmem:[#allocation2 + $0x148] sm:$0xff]
    %v77 = vld [vmem:[#allocation2 + $0x150] sm:$0xff]
    %v78 = vld [vmem:[#allocation2 + $0x158] sm:$0xff]
    %v79 = vld [vmem:[#allocation2 + $0x160] sm:$0xff]
    %v80 = vld [vmem:[#allocation2 + $0x168] sm:$0xff]
    %v81 = vld [vmem:[#allocation2 + $0x170] sm:$0xff]
    %v82 = vld [vmem:[#allocation2 + $0x178] sm:$0xff]
    %v83 = vld [vmem:[#allocation2 + $0x180] sm:$0xff]
    %v84 = vld [vmem:[#allocation2 + $0x188] sm:$0xff]
    %v85 = vld [vmem:[#allocation2 + $0x190] sm:$0xff]
    %v86 = vld [vmem:[#allocation2 + $0x198] sm:$0xff]
    %v87 = vld [vmem:[#allocation2 + $0x1a0] sm:$0xff]
    %v88 = vld [vmem:[#allocation2 + $0x1a8] sm:$0xff]
    %v89 = vld [vmem:[#allocation2 + $0x1b0] sm:$0xff]
    %v90 = vld [vmem:[#allocation2 + $0x1b8] sm:$0xff]
    %v91 = vld [vmem:[#allocation2 + $0x1c0] sm:$0xff]
    %v92 = vld [vmem:[#allocation2 + $0x1c8] sm:$0xff]
    %v93 = vld [vmem:[#allocation2 + $0x1d0] sm:$0xff]
    %v94 = vld [vmem:[#allocation2 + $0x1d8] sm:$0xff]
    %v95 = vld [vmem:[#allocation2 + $0x1e0] sm:$0xff]
    %v96 = vld [vmem:[#allocation2 + $0x1e8] sm:$0xff]
    %v97 = vld [vmem:[#allocation2 + $0x1f0] sm:$0xff]
    %v98 = vld [vmem:[#allocation2 + $0x1f8] sm:$0xff]
    %v99 = vld [vmem:[#allocation2 + $0x200] sm:$0xff]
    %v100 = vld [vmem:[#allocation2 + $0x208] sm:$0xff]
    %v101 = vld [vmem:[#allocation2 + $0x210] sm:$0xff]
    %v102 = vld [vmem:[#allocation2 + $0x218] sm:$0xff]
    %v103 = vld [vmem:[#allocation2 + $0x220] sm:$0xff]
    %v104 = vld [vmem:[#allocation2 + $0x228] sm:$0xff]
    %v105 = vld [vmem:[#allocation2 + $0x230] sm:$0xff]
    %v106 = vld [vmem:[#allocation2 + $0x238] sm:$0xff]
    %v107 = vld [vmem:[#allocation2 + $0x240] sm:$0xff]
    %v108 = vld [vmem:[#allocation2 + $0x248] sm:$0xff]
    %v109 = vld [vmem:[#allocation2 + $0x250] sm:$0xff]
    %v110 = vld [vmem:[#allocation2 + $0x258] sm:$0xff]
    %v111 = vld [vmem:[#allocation2 + $0x260] sm:$0xff]
    %v112 = vld [vmem:[#allocation2 + $0x268] sm:$0xff]
    %v113 = vld [vmem:[#allocation2 + $0x270] sm:$0xff]
    %v114 = vld [vmem:[#allocation2 + $0x278] sm:$0xff]
    %v115 = vld [vmem:[#allocation2 + $0x280] sm:$0xff]
    %v116 = vld [vmem:[#allocation2 + $0x288] sm:$0xff]
    %v117 = vld [vmem:[#allocation2 + $0x290] sm:$0xff]
    %v118 = vld [vmem:[#allocation2 + $0x298] sm:$0xff]
    %v119 = vld [vmem:[#allocation2 + $0x2a0] sm:$0xff]
    %v120 = vld [vmem:[#allocation2 + $0x2a8] sm:$0xff]
    %v121 = vld [vmem:[#allocation2 + $0x2b0] sm:$0xff]
    %v122 = vld [vmem:[#allocation2 + $0x2b8] sm:$0xff]
    %v123 = vld [vmem:[#allocation2 + $0x2c0] sm:$0xff]
    %v124 = vld [vmem:[#allocation2 + $0x2c8] sm:$0xff]
    %v125 = vld [vmem:[#allocation2 + $0x2d0] sm:$0xff]
    %v126 = vld [vmem:[#allocation2 + $0x2d8] sm:$0xff]
    %v127 = vld [vmem:[#allocation2 + $0x2e0] sm:$0xff]
    %v128 = vld [vmem:[#allocation2 + $0x2e8] sm:$0xff]
    %v129 = vld [vmem:[#allocation2 + $0x2f0] sm:$0xff]
    %v130 = vld [vmem:[#allocation2 + $0x2f8] sm:$0xff]
    %v131 = vld [vmem:[#allocation2 + $0x300] sm:$0xff]
    %v132 = vld [vmem:[#allocation2 + $0x308] sm:$0xff]
    %v133 = vld [vmem:[#allocation2 + $0x310] sm:$0xff]
    %v134 = vld [vmem:[#allocation2 + $0x318] sm:$0xff]
    %v135 = vld [vmem:[#allocation2 + $0x320] sm:$0xff]
    %v136 = vld [vmem:[#allocation2 + $0x328] sm:$0xff]
    %v137 = vld [vmem:[#allocation2 + $0x330] sm:$0xff]
    %v138 = vld [vmem:[#allocation2 + $0x338] sm:$0xff]
    %v139 = vld [vmem:[#allocation2 + $0x340] sm:$0xff]
    %v140 = vld [vmem:[#allocation2 + $0x348] sm:$0xff]
    %v141 = vld [vmem:[#allocation2 + $0x350] sm:$0xff]
    %v142 = vld [vmem:[#allocation2 + $0x358] sm:$0xff]
    %v143 = vld [vmem:[#allocation2 + $0x360] sm:$0xff]
    %v144 = vld [vmem:[#allocation2 + $0x368] sm:$0xff]
    %v145 = vld [vmem:[#allocation2 + $0x370] sm:$0xff]
    %v146 = vld [vmem:[#allocation2 + $0x378] sm:$0xff]
    %v147 = vld [vmem:[#allocation2 + $0x380] sm:$0xff]
    %v148 = vld [vmem:[#allocation2 + $0x388] sm:$0xff]
    %v149 = vld [vmem:[#allocation2 + $0x390] sm:$0xff]
    %v150 = vld [vmem:[#allocation2 + $0x398] sm:$0xff]
    %v151 = vld [vmem:[#allocation2 + $0x3a0] sm:$0xff]
    %v152 = vld [vmem:[#allocation2 + $0x3a8] sm:$0xff]
    %v153 = vld [vmem:[#allocation2 + $0x3b0] sm:$0xff]
    %v154 = vld [vmem:[#allocation2 + $0x3b8] sm:$0xff]
    %v155 = vld [vmem:[#allocation2 + $0x3c0] sm:$0xff]
    %v156 = vld [vmem:[#allocation2 + $0x3c8] sm:$0xff]
    %v157 = vld [vmem:[#allocation2 + $0x3d0] sm:$0xff]
    %v158 = vld [vmem:[#allocation2 + $0x3d8] sm:$0xff]
    %v159 = vld [vmem:[#allocation2 + $0x3e0] sm:$0xff]
    %v160 = vld [vmem:[#allocation2 + $0x3e8] sm:$0xff]
    %v161 = vld [vmem:[#allocation2 + $0x3f0] sm:$0xff]
    %v162 = vld [vmem:[#allocation2 + $0x3f8] sm:$0xff]
    %v163 = vld [vmem:[%s1] sm:$0xff]
    %v164 = vld [vmem:[%s1 + $0x8] sm:$0xff]
    %v165 = vld [vmem:[%s1 + $0x10] sm:$0xff]
    %v166 = vld [vmem:[%s1 + $0x18] sm:$0xff]
    %v167 = vld [vmem:[%s1 + $0x20] sm:$0xff]
    %v168 = vld [vmem:[%s1 + $0x28] sm:$0xff]
    %v169 = vld [vmem:[%s1 + $0x30] sm:$0xff]
    %v170 = vld [vmem:[%s1 + $0x38] sm:$0xff]
    %v171 = vld [vmem:[%s1 + $0x40] sm:$0xff]
    %v172 = vld [vmem:[%s1 + $0x48] sm:$0xff]
    %v173 = vld [vmem:[%s1 + $0x50] sm:$0xff]
    %v174 = vld [vmem:[%s1 + $0x58] sm:$0xff]
    %v175 = vld [vmem:[%s1 + $0x60] sm:$0xff]
    %v176 = vld [vmem:[%s1 + $0x68] sm:$0xff]
    %v177 = vld [vmem:[%s1 + $0x70] sm:$0xff]
    %v178 = vld [vmem:[%s1 + $0x78] sm:$0xff]
    %v179 = vld [vmem:[%s2] sm:$0x1]
    %v180 = vld [vmem:[%s3] sm:$0x1]
    %v182 = vlaneseq
    %v183 = vshrl.u32 %v182, 7
    %v184 = vsub.s32 0, %v183
    %v185 = vrot.slane %v179, %v184
    %187 = vmatprep.subr.mxu0 0.0
    %188 = vmatpush1.msra.mxu0 %v163
    %189 = vmatprep.subr.mxu0 0.0
    %190 = vmatpush1.msra.mxu0 %v164
    %191 = vmatprep.subr.mxu0 0.0
    %192 = vmatpush1.msra.mxu0 %v165
    %193 = vmatprep.subr.mxu0 0.0
    %194 = vmatpush1.msra.mxu0 %v166
    %195 = vmatprep.subr.mxu0 0.0
    %196 = vmatpush1.msra.mxu0 %v167
    %197 = vmatprep.subr.mxu0 0.0
    %198 = vmatpush1.msra.mxu0 %v168
    %199 = vmatprep.subr.mxu0 0.0
    %200 = vmatpush1.msra.mxu0 %v169
    %201 = vmatprep.subr.mxu0 0.0
    %202 = vmatpush1.msra.mxu0 %v170
    %203 = vmatprep.subr.mxu0 0.0
    %204 = vmatpush1.msra.mxu0 %v171
    %205 = vmatprep.subr.mxu0 0.0
    %206 = vmatpush1.msra.mxu0 %v172
    %207 = vmatprep.subr.mxu0 0.0
    %208 = vmatpush1.msra.mxu0 %v173
    %209 = vmatprep.subr.mxu0 0.0
    %210 = vmatpush1.msra.mxu0 %v174
    %211 = vmatprep.subr.mxu0 0.0
    %212 = vmatpush1.msra.mxu0 %v175
    %213 = vmatprep.subr.mxu0 0.0
    %214 = vmatpush1.msra.mxu0 %v176
    %215 = vmatprep.subr.mxu0 0.0
    %216 = vmatpush1.msra.mxu0 %v177
    %217 = vmatprep.subr.mxu0 0.0
    %218 = vmatpush1.msra.mxu0 %v178
    %219 = vmatprep.subr.mxu0 0.0
    %220 = vmatpush1.msra.mxu0 0.0
    %221 = vmatprep.subr.mxu0 0.0
    %222 = vmatpush1.msra.mxu0 0.0
    %223 = vmatprep.subr.mxu0 0.0
    %224 = vmatpush1.msra.mxu0 0.0
    %225 = vmatprep.subr.mxu0 0.0
    %226 = vmatpush1.msra.mxu0 0.0
    %227 = vmatprep.subr.mxu0 0.0
    %228 = vmatpush1.msra.mxu0 0.0
    %229 = vmatprep.subr.mxu0 0.0
    %230 = vmatpush1.msra.mxu0 0.0
    %231 = vmatprep.subr.mxu0 0.0
    %232 = vmatpush1.msra.mxu0 0.0
    %233 = vmatprep.subr.mxu0 0.0
    %234 = vmatpush1.msra.mxu0 0.0
    %235 = vmatprep.subr.mxu0 0.0
    %236 = vmatpush1.msra.mxu0 0.0
    %237 = vmatprep.subr.mxu0 0.0
    %238 = vmatpush1.msra.mxu0 0.0
    %239 = vmatprep.subr.mxu0 0.0
    %240 = vmatpush1.msra.mxu0 0.0
    %241 = vmatprep.subr.mxu0 0.0
    %242 = vmatpush1.msra.mxu0 0.0
    %243 = vmatprep.subr.mxu0 0.0
    %244 = vmatpush1.msra.mxu0 0.0
    %245 = vmatprep.subr.mxu0 0.0
    %246 = vmatpush1.msra.mxu0 0.0
    %247 = vmatprep.subr.mxu0 0.0
    %248 = vmatpush1.msra.mxu0 0.0
    %249 = vmatprep.subr.mxu0 0.0
    %250 = vmatpush1.msra.mxu0 0.0
    %251 = vmatprep.mubr.f32.mxu0 0.0
    %252 = vmatmul.mubr.f32.gmra.mrb[0].mxu0 %v35
    %v253 = vpop.f32.mrb[0].mxu0
    %v254 = vadd.f32 %v185, %v253
    %v255 = vpop.f32.mrb[0].mxu0
    %256 = vmatprep.mubr.f32.mxu0 0.0
    %257 = vmatmul.mubr.f32.gmra.mrb[0].mxu0 %v36
    %v258 = vpop.f32.mrb[0].mxu0
    %v259 = vadd.f32 %v185, %v258
    %v260 = vpop.f32.mrb[0].mxu0
    %261 = vmatprep.mubr.f32.mxu0 0.0
    %262 = vmatmul.mubr.f32.gmra.mrb[0].mxu0 %v37
    %v263 = vpop.f32.mrb[0].mxu0
    %v264 = vadd.f32 %v185, %v263
    %v265 = vpop.f32.mrb[0].mxu0
    %266 = vmatprep.mubr.f32.mxu0 0.0
    %267 = vmatmul.mubr.f32.gmra.mrb[0].mxu0 %v38
    %v268 = vpop.f32.mrb[0].mxu0
    %v269 = vadd.f32 %v185, %v268
    %v270 = vpop.f32.mrb[0].mxu0
    %271 = vmatprep.mubr.f32.mxu0 0.0
    %272 = vmatmul.mubr.f32.gmra.mrb[0].mxu0 %v39
    %v273 = vpop.f32.mrb[0].mxu0
    %v274 = vadd.f32 %v185, %v273
    %v275 = vpop.f32.mrb[0].mxu0
    %276 = vmatprep.mubr.f32.mxu0 0.0
    %277 = vmatmul.mubr.f32.gmra.mrb[0].mxu0 %v40
    %v278 = vpop.f32.mrb[0].mxu0
    %v279 = vadd.f32 %v185, %v278
    %v280 = vpop.f32.mrb[0].mxu0
    %281 = vmatprep.mubr.f32.mxu0 0.0
    %282 = vmatmul.mubr.f32.gmra.mrb[0].mxu0 %v41
    %v283 = vpop.f32.mrb[0].mxu0
    %v284 = vadd.f32 %v185, %v283
    %v285 = vpop.f32.mrb[0].mxu0
    %286 = vmatprep.mubr.f32.mxu0 0.0
    %287 = vmatmul.mubr.f32.gmra.mrb[0].mxu0 %v42
    %v288 = vpop.f32.mrb[0].mxu0
    %v289 = vadd.f32 %v185, %v288
    %v290 = vpop.f32.mrb[0].mxu0
    %291 = vmatprep.mubr.f32.mxu0 0.0
    %292 = vmatmul.mubr.f32.gmra.mrb[0].mxu0 %v43
    %v293 = vpop.f32.mrb[0].mxu0
    %v294 = vadd.f32 %v185, %v293
    %v295 = vpop.f32.mrb[0].mxu0
    %296 = vmatprep.mubr.f32.mxu0 0.0
    %297 = vmatmul.mubr.f32.gmra.mrb[0].mxu0 %v44
    %v298 = vpop.f32.mrb[0].mxu0
    %v299 = vadd.f32 %v185, %v298
    %v300 = vpop.f32.mrb[0].mxu0
    %301 = vmatprep.mubr.f32.mxu0 0.0
    %302 = vmatmul.mubr.f32.gmra.mrb[0].mxu0 %v45
    %v303 = vpop.f32.mrb[0].mxu0
    %v304 = vadd.f32 %v185, %v303
    %v305 = vpop.f32.mrb[0].mxu0
    %306 = vmatprep.mubr.f32.mxu0 0.0
    %307 = vmatmul.mubr.f32.gmra.mrb[0].mxu0 %v46
    %v308 = vpop.f32.mrb[0].mxu0
    %v309 = vadd.f32 %v185, %v308
    %v310 = vpop.f32.mrb[0].mxu0
    %311 = vmatprep.mubr.f32.mxu0 0.0
    %312 = vmatmul.mubr.f32.gmra.mrb[0].mxu0 %v47
    %v313 = vpop.f32.mrb[0].mxu0
    %v314 = vadd.f32 %v185, %v313
    %v315 = vpop.f32.mrb[0].mxu0
    %316 = vmatprep.mubr.f32.mxu0 0.0
    %317 = vmatmul.mubr.f32.gmra.mrb[0].mxu0 %v48
    %v318 = vpop.f32.mrb[0].mxu0
    %v319 = vadd.f32 %v185, %v318
    %v320 = vpop.f32.mrb[0].mxu0
    %321 = vmatprep.mubr.f32.mxu0 0.0
    %322 = vmatmul.mubr.f32.gmra.mrb[0].mxu0 %v49
    %v323 = vpop.f32.mrb[0].mxu0
    %v324 = vadd.f32 %v185, %v323
    %v325 = vpop.f32.mrb[0].mxu0
    %326 = vmatprep.mubr.f32.mxu0 0.0
    %327 = vmatmul.mubr.f32.gmra.mrb[0].mxu0 %v50
    %v328 = vpop.f32.mrb[0].mxu0
    %v329 = vadd.f32 %v185, %v328
    %v330 = vpop.f32.mrb[0].mxu0
    %331 = vmatprep.mubr.f32.mxu0 0.0
    %332 = vmatmul.mubr.f32.gmra.mrb[0].mxu0 %v51
    %v333 = vpop.f32.mrb[0].mxu0
    %v334 = vadd.f32 %v185, %v333
    %v335 = vpop.f32.mrb[0].mxu0
    %336 = vmatprep.mubr.f32.mxu0 0.0
    %337 = vmatmul.mubr.f32.gmra.mrb[0].mxu0 %v52
    %v338 = vpop.f32.mrb[0].mxu0
    %v339 = vadd.f32 %v185, %v338
    %v340 = vpop.f32.mrb[0].mxu0
    %341 = vmatprep.mubr.f32.mxu0 0.0
    %342 = vmatmul.mubr.f32.gmra.mrb[0].mxu0 %v53
    %v343 = vpop.f32.mrb[0].mxu0
    %v344 = vadd.f32 %v185, %v343
    %v345 = vpop.f32.mrb[0].mxu0
    %346 = vmatprep.mubr.f32.mxu0 0.0
    %347 = vmatmul.mubr.f32.gmra.mrb[0].mxu0 %v54
    %v348 = vpop.f32.mrb[0].mxu0
    %v349 = vadd.f32 %v185, %v348
    %v350 = vpop.f32.mrb[0].mxu0
    %351 = vmatprep.mubr.f32.mxu0 0.0
    %352 = vmatmul.mubr.f32.gmra.mrb[0].mxu0 %v55
    %v353 = vpop.f32.mrb[0].mxu0
    %v354 = vadd.f32 %v185, %v353
    %v355 = vpop.f32.mrb[0].mxu0
    %356 = vmatprep.mubr.f32.mxu0 0.0
    %357 = vmatmul.mubr.f32.gmra.mrb[0].mxu0 %v56
    %v358 = vpop.f32.mrb[0].mxu0
    %v359 = vadd.f32 %v185, %v358
    %v360 = vpop.f32.mrb[0].mxu0
    %361 = vmatprep.mubr.f32.mxu0 0.0
    %362 = vmatmul.mubr.f32.gmra.mrb[0].mxu0 %v57
    %v363 = vpop.f32.mrb[0].mxu0
    %v364 = vadd.f32 %v185, %v363
    %v365 = vpop.f32.mrb[0].mxu0
    %366 = vmatprep.mubr.f32.mxu0 0.0
    %367 = vmatmul.mubr.f32.gmra.mrb[0].mxu0 %v58
    %v368 = vpop.f32.mrb[0].mxu0
    %v369 = vadd.f32 %v185, %v368
    %v370 = vpop.f32.mrb[0].mxu0
    %371 = vmatprep.mubr.f32.mxu0 0.0
    %372 = vmatmul.mubr.f32.gmra.mrb[0].mxu0 %v59
    %v373 = vpop.f32.mrb[0].mxu0
    %v374 = vadd.f32 %v185, %v373
    %v375 = vpop.f32.mrb[0].mxu0
    %376 = vmatprep.mubr.f32.mxu0 0.0
    %377 = vmatmul.mubr.f32.gmra.mrb[0].mxu0 %v60
    %v378 = vpop.f32.mrb[0].mxu0
    %v379 = vadd.f32 %v185, %v378
    %v380 = vpop.f32.mrb[0].mxu0
    %381 = vmatprep.mubr.f32.mxu0 0.0
    %382 = vmatmul.mubr.f32.gmra.mrb[0].mxu0 %v61
    %v383 = vpop.f32.mrb[0].mxu0
    %v384 = vadd.f32 %v185, %v383
    %v385 = vpop.f32.mrb[0].mxu0
    %386 = vmatprep.mubr.f32.mxu0 0.0
    %387 = vmatmul.mubr.f32.gmra.mrb[0].mxu0 %v62
    %v388 = vpop.f32.mrb[0].mxu0
    %v389 = vadd.f32 %v185, %v388
    %v390 = vpop.f32.mrb[0].mxu0
    %391 = vmatprep.mubr.f32.mxu0 0.0
    %392 = vmatmul.mubr.f32.gmra.mrb[0].mxu0 %v63
    %v393 = vpop.f32.mrb[0].mxu0
    %v394 = vadd.f32 %v185, %v393
    %v395 = vpop.f32.mrb[0].mxu0
    %396 = vmatprep.mubr.f32.mxu0 0.0
    %397 = vmatmul.mubr.f32.gmra.mrb[0].mxu0 %v64
    %v398 = vpop.f32.mrb[0].mxu0
    %v399 = vadd.f32 %v185, %v398
    %v400 = vpop.f32.mrb[0].mxu0
    %401 = vmatprep.mubr.f32.mxu0 0.0
    %402 = vmatmul.mubr.f32.gmra.mrb[0].mxu0 %v65
    %v403 = vpop.f32.mrb[0].mxu0
    %v404 = vadd.f32 %v185, %v403
    %v405 = vpop.f32.mrb[0].mxu0
    %406 = vmatprep.mubr.f32.mxu0 0.0
    %407 = vmatmul.mubr.f32.gmra.mrb[0].mxu0 %v66
    %v408 = vpop.f32.mrb[0].mxu0
    %v409 = vadd.f32 %v185, %v408
    %v410 = vpop.f32.mrb[0].mxu0
    %411 = vmatprep.mubr.f32.mxu0 0.0
    %412 = vmatmul.mubr.f32.gmra.mrb[0].mxu0 %v67
    %v413 = vpop.f32.mrb[0].mxu0
    %v414 = vadd.f32 %v185, %v413
    %v415 = vpop.f32.mrb[0].mxu0
    %416 = vmatprep.mubr.f32.mxu0 0.0
    %417 = vmatmul.mubr.f32.gmra.mrb[0].mxu0 %v68
    %v418 = vpop.f32.mrb[0].mxu0
    %v419 = vadd.f32 %v185, %v418
    %v420 = vpop.f32.mrb[0].mxu0
    %421 = vmatprep.mubr.f32.mxu0 0.0
    %422 = vmatmul.mubr.f32.gmra.mrb[0].mxu0 %v69
    %v423 = vpop.f32.mrb[0].mxu0
    %v424 = vadd.f32 %v185, %v423
    %v425 = vpop.f32.mrb[0].mxu0
    %426 = vmatprep.mubr.f32.mxu0 0.0
    %427 = vmatmul.mubr.f32.gmra.mrb[0].mxu0 %v70
    %v428 = vpop.f32.mrb[0].mxu0
    %v429 = vadd.f32 %v185, %v428
    %v430 = vpop.f32.mrb[0].mxu0
    %431 = vmatprep.mubr.f32.mxu0 0.0
    %432 = vmatmul.mubr.f32.gmra.mrb[0].mxu0 %v71
    %v433 = vpop.f32.mrb[0].mxu0
    %v434 = vadd.f32 %v185, %v433
    %v435 = vpop.f32.mrb[0].mxu0
    %436 = vmatprep.mubr.f32.mxu0 0.0
    %437 = vmatmul.mubr.f32.gmra.mrb[0].mxu0 %v72
    %v438 = vpop.f32.mrb[0].mxu0
    %v439 = vadd.f32 %v185, %v438
    %v440 = vpop.f32.mrb[0].mxu0
    %441 = vmatprep.mubr.f32.mxu0 0.0
    %442 = vmatmul.mubr.f32.gmra.mrb[0].mxu0 %v73
    %v443 = vpop.f32.mrb[0].mxu0
    %v444 = vadd.f32 %v185, %v443
    %v445 = vpop.f32.mrb[0].mxu0
    %446 = vmatprep.mubr.f32.mxu0 0.0
    %447 = vmatmul.mubr.f32.gmra.mrb[0].mxu0 %v74
    %v448 = vpop.f32.mrb[0].mxu0
    %v449 = vadd.f32 %v185, %v448
    %v450 = vpop.f32.mrb[0].mxu0
    %451 = vmatprep.mubr.f32.mxu0 0.0
    %452 = vmatmul.mubr.f32.gmra.mrb[0].mxu0 %v75
    %v453 = vpop.f32.mrb[0].mxu0
    %v454 = vadd.f32 %v185, %v453
    %v455 = vpop.f32.mrb[0].mxu0
    %456 = vmatprep.mubr.f32.mxu0 0.0
    %457 = vmatmul.mubr.f32.gmra.mrb[0].mxu0 %v76
    %v458 = vpop.f32.mrb[0].mxu0
    %v459 = vadd.f32 %v185, %v458
    %v460 = vpop.f32.mrb[0].mxu0
    %461 = vmatprep.mubr.f32.mxu0 0.0
    %462 = vmatmul.mubr.f32.gmra.mrb[0].mxu0 %v77
    %v463 = vpop.f32.mrb[0].mxu0
    %v464 = vadd.f32 %v185, %v463
    %v465 = vpop.f32.mrb[0].mxu0
    %466 = vmatprep.mubr.f32.mxu0 0.0
    %467 = vmatmul.mubr.f32.gmra.mrb[0].mxu0 %v78
    %v468 = vpop.f32.mrb[0].mxu0
    %v469 = vadd.f32 %v185, %v468
    %v470 = vpop.f32.mrb[0].mxu0
    %471 = vmatprep.mubr.f32.mxu0 0.0
    %472 = vmatmul.mubr.f32.gmra.mrb[0].mxu0 %v79
    %v473 = vpop.f32.mrb[0].mxu0
    %v474 = vadd.f32 %v185, %v473
    %v475 = vpop.f32.mrb[0].mxu0
    %476 = vmatprep.mubr.f32.mxu0 0.0
    %477 = vmatmul.mubr.f32.gmra.mrb[0].mxu0 %v80
    %v478 = vpop.f32.mrb[0].mxu0
    %v479 = vadd.f32 %v185, %v478
    %v480 = vpop.f32.mrb[0].mxu0
    %481 = vmatprep.mubr.f32.mxu0 0.0
    %482 = vmatmul.mubr.f32.gmra.mrb[0].mxu0 %v81
    %v483 = vpop.f32.mrb[0].mxu0
    %v484 = vadd.f32 %v185, %v483
    %v485 = vpop.f32.mrb[0].mxu0
    %486 = vmatprep.mubr.f32.mxu0 0.0
    %487 = vmatmul.mubr.f32.gmra.mrb[0].mxu0 %v82
    %v488 = vpop.f32.mrb[0].mxu0
    %v489 = vadd.f32 %v185, %v488
    %v490 = vpop.f32.mrb[0].mxu0
    %491 = vmatprep.mubr.f32.mxu0 0.0
    %492 = vmatmul.mubr.f32.gmra.mrb[0].mxu0 %v83
    %v493 = vpop.f32.mrb[0].mxu0
    %v494 = vadd.f32 %v185, %v493
    %v495 = vpop.f32.mrb[0].mxu0
    %496 = vmatprep.mubr.f32.mxu0 0.0
    %497 = vmatmul.mubr.f32.gmra.mrb[0].mxu0 %v84
    %v498 = vpop.f32.mrb[0].mxu0
    %v499 = vadd.f32 %v185, %v498
    %v500 = vpop.f32.mrb[0].mxu0
    %501 = vmatprep.mubr.f32.mxu0 0.0
    %502 = vmatmul.mubr.f32.gmra.mrb[0].mxu0 %v85
    %v503 = vpop.f32.mrb[0].mxu0
    %v504 = vadd.f32 %v185, %v503
    %v505 = vpop.f32.mrb[0].mxu0
    %506 = vmatprep.mubr.f32.mxu0 0.0
    %507 = vmatmul.mubr.f32.gmra.mrb[0].mxu0 %v86
    %v508 = vpop.f32.mrb[0].mxu0
    %v509 = vadd.f32 %v185, %v508
    %v510 = vpop.f32.mrb[0].mxu0
    %511 = vmatprep.mubr.f32.mxu0 0.0
    %512 = vmatmul.mubr.f32.gmra.mrb[0].mxu0 %v87
    %v513 = vpop.f32.mrb[0].mxu0
    %v514 = vadd.f32 %v185, %v513
    %v515 = vpop.f32.mrb[0].mxu0
    %516 = vmatprep.mubr.f32.mxu0 0.0
    %517 = vmatmul.mubr.f32.gmra.mrb[0].mxu0 %v88
    %v518 = vpop.f32.mrb[0].mxu0
    %v519 = vadd.f32 %v185, %v518
    %v520 = vpop.f32.mrb[0].mxu0
    %521 = vmatprep.mubr.f32.mxu0 0.0
    %522 = vmatmul.mubr.f32.gmra.mrb[0].mxu0 %v89
    %v523 = vpop.f32.mrb[0].mxu0
    %v524 = vadd.f32 %v185, %v523
    %v525 = vpop.f32.mrb[0].mxu0
    %526 = vmatprep.mubr.f32.mxu0 0.0
    %527 = vmatmul.mubr.f32.gmra.mrb[0].mxu0 %v90
    %v528 = vpop.f32.mrb[0].mxu0
    %v529 = vadd.f32 %v185, %v528
    %v530 = vpop.f32.mrb[0].mxu0
    %531 = vmatprep.mubr.f32.mxu0 0.0
    %532 = vmatmul.mubr.f32.gmra.mrb[0].mxu0 %v91
    %v533 = vpop.f32.mrb[0].mxu0
    %v534 = vadd.f32 %v185, %v533
    %v535 = vpop.f32.mrb[0].mxu0
    %536 = vmatprep.mubr.f32.mxu0 0.0
    %537 = vmatmul.mubr.f32.gmra.mrb[0].mxu0 %v92
    %v538 = vpop.f32.mrb[0].mxu0
    %v539 = vadd.f32 %v185, %v538
    %v540 = vpop.f32.mrb[0].mxu0
    %541 = vmatprep.mubr.f32.mxu0 0.0
    %542 = vmatmul.mubr.f32.gmra.mrb[0].mxu0 %v93
    %v543 = vpop.f32.mrb[0].mxu0
    %v544 = vadd.f32 %v185, %v543
    %v545 = vpop.f32.mrb[0].mxu0
    %546 = vmatprep.mubr.f32.mxu0 0.0
    %547 = vmatmul.mubr.f32.gmra.mrb[0].mxu0 %v94
    %v548 = vpop.f32.mrb[0].mxu0
    %v549 = vadd.f32 %v185, %v548
    %v550 = vpop.f32.mrb[0].mxu0
    %551 = vmatprep.mubr.f32.mxu0 0.0
    %552 = vmatmul.mubr.f32.gmra.mrb[0].mxu0 %v95
    %v553 = vpop.f32.mrb[0].mxu0
    %v554 = vadd.f32 %v185, %v553
    %v555 = vpop.f32.mrb[0].mxu0
    %556 = vmatprep.mubr.f32.mxu0 0.0
    %557 = vmatmul.mubr.f32.gmra.mrb[0].mxu0 %v96
    %v558 = vpop.f32.mrb[0].mxu0
    %v559 = vadd.f32 %v185, %v558
    %v560 = vpop.f32.mrb[0].mxu0
    %561 = vmatprep.mubr.f32.mxu0 0.0
    %562 = vmatmul.mubr.f32.gmra.mrb[0].mxu0 %v97
    %v563 = vpop.f32.mrb[0].mxu0
    %v564 = vadd.f32 %v185, %v563
    %v565 = vpop.f32.mrb[0].mxu0
    %566 = vmatprep.mubr.f32.mxu0 0.0
    %567 = vmatmul.mubr.f32.gmra.mrb[0].mxu0 %v98
    %v568 = vpop.f32.mrb[0].mxu0
    %v569 = vadd.f32 %v185, %v568
    %v570 = vpop.f32.mrb[0].mxu0
    %571 = vmatprep.mubr.f32.mxu0 0.0
    %572 = vmatmul.mubr.f32.gmra.mrb[0].mxu0 %v99
    %v573 = vpop.f32.mrb[0].mxu0
    %v574 = vadd.f32 %v185, %v573
    %v575 = vpop.f32.mrb[0].mxu0
    %576 = vmatprep.mubr.f32.mxu0 0.0
    %577 = vmatmul.mubr.f32.gmra.mrb[0].mxu0 %v100
    %v578 = vpop.f32.mrb[0].mxu0
    %v579 = vadd.f32 %v185, %v578
    %v580 = vpop.f32.mrb[0].mxu0
    %581 = vmatprep.mubr.f32.mxu0 0.0
    %582 = vmatmul.mubr.f32.gmra.mrb[0].mxu0 %v101
    %v583 = vpop.f32.mrb[0].mxu0
    %v584 = vadd.f32 %v185, %v583
    %v585 = vpop.f32.mrb[0].mxu0
    %586 = vmatprep.mubr.f32.mxu0 0.0
    %587 = vmatmul.mubr.f32.gmra.mrb[0].mxu0 %v102
    %v588 = vpop.f32.mrb[0].mxu0
    %v589 = vadd.f32 %v185, %v588
    %v590 = vpop.f32.mrb[0].mxu0
    %591 = vmatprep.mubr.f32.mxu0 0.0
    %592 = vmatmul.mubr.f32.gmra.mrb[0].mxu0 %v103
    %v593 = vpop.f32.mrb[0].mxu0
    %v594 = vadd.f32 %v185, %v593
    %v595 = vpop.f32.mrb[0].mxu0
    %596 = vmatprep.mubr.f32.mxu0 0.0
    %597 = vmatmul.mubr.f32.gmra.mrb[0].mxu0 %v104
    %v598 = vpop.f32.mrb[0].mxu0
    %v599 = vadd.f32 %v185, %v598
    %v600 = vpop.f32.mrb[0].mxu0
    %601 = vmatprep.mubr.f32.mxu0 0.0
    %602 = vmatmul.mubr.f32.gmra.mrb[0].mxu0 %v105
    %v603 = vpop.f32.mrb[0].mxu0
    %v604 = vadd.f32 %v185, %v603
    %v605 = vpop.f32.mrb[0].mxu0
    %606 = vmatprep.mubr.f32.mxu0 0.0
    %607 = vmatmul.mubr.f32.gmra.mrb[0].mxu0 %v106
    %v608 = vpop.f32.mrb[0].mxu0
    %v609 = vadd.f32 %v185, %v608
    %v610 = vpop.f32.mrb[0].mxu0
    %611 = vmatprep.mubr.f32.mxu0 0.0
    %612 = vmatmul.mubr.f32.gmra.mrb[0].mxu0 %v107
    %v613 = vpop.f32.mrb[0].mxu0
    %v614 = vadd.f32 %v185, %v613
    %v615 = vpop.f32.mrb[0].mxu0
    %616 = vmatprep.mubr.f32.mxu0 0.0
    %617 = vmatmul.mubr.f32.gmra.mrb[0].mxu0 %v108
    %v618 = vpop.f32.mrb[0].mxu0
    %v619 = vadd.f32 %v185, %v618
    %v620 = vpop.f32.mrb[0].mxu0
    %621 = vmatprep.mubr.f32.mxu0 0.0
    %622 = vmatmul.mubr.f32.gmra.mrb[0].mxu0 %v109
    %v623 = vpop.f32.mrb[0].mxu0
    %v624 = vadd.f32 %v185, %v623
    %v625 = vpop.f32.mrb[0].mxu0
    %626 = vmatprep.mubr.f32.mxu0 0.0
    %627 = vmatmul.mubr.f32.gmra.mrb[0].mxu0 %v110
    %v628 = vpop.f32.mrb[0].mxu0
    %v629 = vadd.f32 %v185, %v628
    %v630 = vpop.f32.mrb[0].mxu0
    %631 = vmatprep.mubr.f32.mxu0 0.0
    %632 = vmatmul.mubr.f32.gmra.mrb[0].mxu0 %v111
    %v633 = vpop.f32.mrb[0].mxu0
    %v634 = vadd.f32 %v185, %v633
    %v635 = vpop.f32.mrb[0].mxu0
    %636 = vmatprep.mubr.f32.mxu0 0.0
    %637 = vmatmul.mubr.f32.gmra.mrb[0].mxu0 %v112
    %v638 = vpop.f32.mrb[0].mxu0
    %v639 = vadd.f32 %v185, %v638
    %v640 = vpop.f32.mrb[0].mxu0
    %641 = vmatprep.mubr.f32.mxu0 0.0
    %642 = vmatmul.mubr.f32.gmra.mrb[0].mxu0 %v113
    %v643 = vpop.f32.mrb[0].mxu0
    %v644 = vadd.f32 %v185, %v643
    %v645 = vpop.f32.mrb[0].mxu0
    %646 = vmatprep.mubr.f32.mxu0 0.0
    %647 = vmatmul.mubr.f32.gmra.mrb[0].mxu0 %v114
    %v648 = vpop.f32.mrb[0].mxu0
    %v649 = vadd.f32 %v185, %v648
    %v650 = vpop.f32.mrb[0].mxu0
    %651 = vmatprep.mubr.f32.mxu0 0.0
    %652 = vmatmul.mubr.f32.gmra.mrb[0].mxu0 %v115
    %v653 = vpop.f32.mrb[0].mxu0
    %v654 = vadd.f32 %v185, %v653
    %v655 = vpop.f32.mrb[0].mxu0
    %656 = vmatprep.mubr.f32.mxu0 0.0
    %657 = vmatmul.mubr.f32.gmra.mrb[0].mxu0 %v116
    %v658 = vpop.f32.mrb[0].mxu0
    %v659 = vadd.f32 %v185, %v658
    %v660 = vpop.f32.mrb[0].mxu0
    %661 = vmatprep.mubr.f32.mxu0 0.0
    %662 = vmatmul.mubr.f32.gmra.mrb[0].mxu0 %v117
    %v663 = vpop.f32.mrb[0].mxu0
    %v664 = vadd.f32 %v185, %v663
    %v665 = vpop.f32.mrb[0].mxu0
    %666 = vmatprep.mubr.f32.mxu0 0.0
    %667 = vmatmul.mubr.f32.gmra.mrb[0].mxu0 %v118
    %v668 = vpop.f32.mrb[0].mxu0
    %v669 = vadd.f32 %v185, %v668
    %v670 = vpop.f32.mrb[0].mxu0
    %671 = vmatprep.mubr.f32.mxu0 0.0
    %672 = vmatmul.mubr.f32.gmra.mrb[0].mxu0 %v119
    %v673 = vpop.f32.mrb[0].mxu0
    %v674 = vadd.f32 %v185, %v673
    %v675 = vpop.f32.mrb[0].mxu0
    %676 = vmatprep.mubr.f32.mxu0 0.0
    %677 = vmatmul.mubr.f32.gmra.mrb[0].mxu0 %v120
    %v678 = vpop.f32.mrb[0].mxu0
    %v679 = vadd.f32 %v185, %v678
    %v680 = vpop.f32.mrb[0].mxu0
    %681 = vmatprep.mubr.f32.mxu0 0.0
    %682 = vmatmul.mubr.f32.gmra.mrb[0].mxu0 %v121
    %v683 = vpop.f32.mrb[0].mxu0
    %v684 = vadd.f32 %v185, %v683
    %v685 = vpop.f32.mrb[0].mxu0
    %686 = vmatprep.mubr.f32.mxu0 0.0
    %687 = vmatmul.mubr.f32.gmra.mrb[0].mxu0 %v122
    %v688 = vpop.f32.mrb[0].mxu0
    %v689 = vadd.f32 %v185, %v688
    %v690 = vpop.f32.mrb[0].mxu0
    %691 = vmatprep.mubr.f32.mxu0 0.0
    %692 = vmatmul.mubr.f32.gmra.mrb[0].mxu0 %v123
    %v693 = vpop.f32.mrb[0].mxu0
    %v694 = vadd.f32 %v185, %v693
    %v695 = vpop.f32.mrb[0].mxu0
    %696 = vmatprep.mubr.f32.mxu0 0.0
    %697 = vmatmul.mubr.f32.gmra.mrb[0].mxu0 %v124
    %v698 = vpop.f32.mrb[0].mxu0
    %v699 = vadd.f32 %v185, %v698
    %v700 = vpop.f32.mrb[0].mxu0
    %701 = vmatprep.mubr.f32.mxu0 0.0
    %702 = vmatmul.mubr.f32.gmra.mrb[0].mxu0 %v125
    %v703 = vpop.f32.mrb[0].mxu0
    %v704 = vadd.f32 %v185, %v703
    %v705 = vpop.f32.mrb[0].mxu0
    %706 = vmatprep.mubr.f32.mxu0 0.0
    %707 = vmatmul.mubr.f32.gmra.mrb[0].mxu0 %v126
    %v708 = vpop.f32.mrb[0].mxu0
    %v709 = vadd.f32 %v185, %v708
    %v710 = vpop.f32.mrb[0].mxu0
    %711 = vmatprep.mubr.f32.mxu0 0.0
    %712 = vmatmul.mubr.f32.gmra.mrb[0].mxu0 %v127
    %v713 = vpop.f32.mrb[0].mxu0
    %v714 = vadd.f32 %v185, %v713
    %v715 = vpop.f32.mrb[0].mxu0
    %716 = vmatprep.mubr.f32.mxu0 0.0
    %717 = vmatmul.mubr.f32.gmra.mrb[0].mxu0 %v128
    %v718 = vpop.f32.mrb[0].mxu0
    %v719 = vadd.f32 %v185, %v718
    %v720 = vpop.f32.mrb[0].mxu0
    %721 = vmatprep.mubr.f32.mxu0 0.0
    %722 = vmatmul.mubr.f32.gmra.mrb[0].mxu0 %v129
    %v723 = vpop.f32.mrb[0].mxu0
    %v724 = vadd.f32 %v185, %v723
    %v725 = vpop.f32.mrb[0].mxu0
    %726 = vmatprep.mubr.f32.mxu0 0.0
    %727 = vmatmul.mubr.f32.gmra.mrb[0].mxu0 %v130
    %v728 = vpop.f32.mrb[0].mxu0
    %v729 = vadd.f32 %v185, %v728
    %v730 = vpop.f32.mrb[0].mxu0
    %731 = vmatprep.mubr.f32.mxu0 0.0
    %732 = vmatmul.mubr.f32.gmra.mrb[0].mxu0 %v131
    %v733 = vpop.f32.mrb[0].mxu0
    %v734 = vadd.f32 %v185, %v733
    %v735 = vpop.f32.mrb[0].mxu0
    %736 = vmatprep.mubr.f32.mxu0 0.0
    %737 = vmatmul.mubr.f32.gmra.mrb[0].mxu0 %v132
    %v738 = vpop.f32.mrb[0].mxu0
    %v739 = vadd.f32 %v185, %v738
    %v740 = vpop.f32.mrb[0].mxu0
    %741 = vmatprep.mubr.f32.mxu0 0.0
    %742 = vmatmul.mubr.f32.gmra.mrb[0].mxu0 %v133
    %v743 = vpop.f32.mrb[0].mxu0
    %v744 = vadd.f32 %v185, %v743
    %v745 = vpop.f32.mrb[0].mxu0
    %746 = vmatprep.mubr.f32.mxu0 0.0
    %747 = vmatmul.mubr.f32.gmra.mrb[0].mxu0 %v134
    %v748 = vpop.f32.mrb[0].mxu0
    %v749 = vadd.f32 %v185, %v748
    %v750 = vpop.f32.mrb[0].mxu0
    %751 = vmatprep.mubr.f32.mxu0 0.0
    %752 = vmatmul.mubr.f32.gmra.mrb[0].mxu0 %v135
    %v753 = vpop.f32.mrb[0].mxu0
    %v754 = vadd.f32 %v185, %v753
    %v755 = vpop.f32.mrb[0].mxu0
    %756 = vmatprep.mubr.f32.mxu0 0.0
    %757 = vmatmul.mubr.f32.gmra.mrb[0].mxu0 %v136
    %v758 = vpop.f32.mrb[0].mxu0
    %v759 = vadd.f32 %v185, %v758
    %v760 = vpop.f32.mrb[0].mxu0
    %761 = vmatprep.mubr.f32.mxu0 0.0
    %762 = vmatmul.mubr.f32.gmra.mrb[0].mxu0 %v137
    %v763 = vpop.f32.mrb[0].mxu0
    %v764 = vadd.f32 %v185, %v763
    %v765 = vpop.f32.mrb[0].mxu0
    %766 = vmatprep.mubr.f32.mxu0 0.0
    %767 = vmatmul.mubr.f32.gmra.mrb[0].mxu0 %v138
    %v768 = vpop.f32.mrb[0].mxu0
    %v769 = vadd.f32 %v185, %v768
    %v770 = vpop.f32.mrb[0].mxu0
    %771 = vmatprep.mubr.f32.mxu0 0.0
    %772 = vmatmul.mubr.f32.gmra.mrb[0].mxu0 %v139
    %v773 = vpop.f32.mrb[0].mxu0
    %v774 = vadd.f32 %v185, %v773
    %v775 = vpop.f32.mrb[0].mxu0
    %776 = vmatprep.mubr.f32.mxu0 0.0
    %777 = vmatmul.mubr.f32.gmra.mrb[0].mxu0 %v140
    %v778 = vpop.f32.mrb[0].mxu0
    %v779 = vadd.f32 %v185, %v778
    %v780 = vpop.f32.mrb[0].mxu0
    %781 = vmatprep.mubr.f32.mxu0 0.0
    %782 = vmatmul.mubr.f32.gmra.mrb[0].mxu0 %v141
    %v783 = vpop.f32.mrb[0].mxu0
    %v784 = vadd.f32 %v185, %v783
    %v785 = vpop.f32.mrb[0].mxu0
    %786 = vmatprep.mubr.f32.mxu0 0.0
    %787 = vmatmul.mubr.f32.gmra.mrb[0].mxu0 %v142
    %v788 = vpop.f32.mrb[0].mxu0
    %v789 = vadd.f32 %v185, %v788
    %v790 = vpop.f32.mrb[0].mxu0
    %791 = vmatprep.mubr.f32.mxu0 0.0
    %792 = vmatmul.mubr.f32.gmra.mrb[0].mxu0 %v143
    %v793 = vpop.f32.mrb[0].mxu0
    %v794 = vadd.f32 %v185, %v793
    %v795 = vpop.f32.mrb[0].mxu0
    %796 = vmatprep.mubr.f32.mxu0 0.0
    %797 = vmatmul.mubr.f32.gmra.mrb[0].mxu0 %v144
    %v798 = vpop.f32.mrb[0].mxu0
    %v799 = vadd.f32 %v185, %v798
    %v800 = vpop.f32.mrb[0].mxu0
    %801 = vmatprep.mubr.f32.mxu0 0.0
    %802 = vmatmul.mubr.f32.gmra.mrb[0].mxu0 %v145
    %v803 = vpop.f32.mrb[0].mxu0
    %v804 = vadd.f32 %v185, %v803
    %v805 = vpop.f32.mrb[0].mxu0
    %806 = vmatprep.mubr.f32.mxu0 0.0
    %807 = vmatmul.mubr.f32.gmra.mrb[0].mxu0 %v146
    %v808 = vpop.f32.mrb[0].mxu0
    %v809 = vadd.f32 %v185, %v808
    %v810 = vpop.f32.mrb[0].mxu0
    %811 = vmatprep.mubr.f32.mxu0 0.0
    %812 = vmatmul.mubr.f32.gmra.mrb[0].mxu0 %v147
    %v813 = vpop.f32.mrb[0].mxu0
    %v814 = vadd.f32 %v185, %v813
    %v815 = vpop.f32.mrb[0].mxu0
    %816 = vmatprep.mubr.f32.mxu0 0.0
    %817 = vmatmul.mubr.f32.gmra.mrb[0].mxu0 %v148
    %v818 = vpop.f32.mrb[0].mxu0
    %v819 = vadd.f32 %v185, %v818
    %v820 = vpop.f32.mrb[0].mxu0
    %821 = vmatprep.mubr.f32.mxu0 0.0
    %822 = vmatmul.mubr.f32.gmra.mrb[0].mxu0 %v149
    %v823 = vpop.f32.mrb[0].mxu0
    %v824 = vadd.f32 %v185, %v823
    %v825 = vpop.f32.mrb[0].mxu0
    %826 = vmatprep.mubr.f32.mxu0 0.0
    %827 = vmatmul.mubr.f32.gmra.mrb[0].mxu0 %v150
    %v828 = vpop.f32.mrb[0].mxu0
    %v829 = vadd.f32 %v185, %v828
    %v830 = vpop.f32.mrb[0].mxu0
    %831 = vmatprep.mubr.f32.mxu0 0.0
    %832 = vmatmul.mubr.f32.gmra.mrb[0].mxu0 %v151
    %v833 = vpop.f32.mrb[0].mxu0
    %v834 = vadd.f32 %v185, %v833
    %v835 = vpop.f32.mrb[0].mxu0
    %836 = vmatprep.mubr.f32.mxu0 0.0
    %837 = vmatmul.mubr.f32.gmra.mrb[0].mxu0 %v152
    %v838 = vpop.f32.mrb[0].mxu0
    %v839 = vadd.f32 %v185, %v838
    %v840 = vpop.f32.mrb[0].mxu0
    %841 = vmatprep.mubr.f32.mxu0 0.0
    %842 = vmatmul.mubr.f32.gmra.mrb[0].mxu0 %v153
    %v843 = vpop.f32.mrb[0].mxu0
    %v844 = vadd.f32 %v185, %v843
    %v845 = vpop.f32.mrb[0].mxu0
    %846 = vmatprep.mubr.f32.mxu0 0.0
    %847 = vmatmul.mubr.f32.gmra.mrb[0].mxu0 %v154
    %v848 = vpop.f32.mrb[0].mxu0
    %v849 = vadd.f32 %v185, %v848
    %v850 = vpop.f32.mrb[0].mxu0
    %851 = vmatprep.mubr.f32.mxu0 0.0
    %852 = vmatmul.mubr.f32.gmra.mrb[0].mxu0 %v155
    %v853 = vpop.f32.mrb[0].mxu0
    %v854 = vadd.f32 %v185, %v853
    %v855 = vpop.f32.mrb[0].mxu0
    %856 = vmatprep.mubr.f32.mxu0 0.0
    %857 = vmatmul.mubr.f32.gmra.mrb[0].mxu0 %v156
    %v858 = vpop.f32.mrb[0].mxu0
    %v859 = vadd.f32 %v185, %v858
    %v860 = vpop.f32.mrb[0].mxu0
    %861 = vmatprep.mubr.f32.mxu0 0.0
    %862 = vmatmul.mubr.f32.gmra.mrb[0].mxu0 %v157
    %v863 = vpop.f32.mrb[0].mxu0
    %v864 = vadd.f32 %v185, %v863
    %v865 = vpop.f32.mrb[0].mxu0
    %866 = vmatprep.mubr.f32.mxu0 0.0
    %867 = vmatmul.mubr.f32.gmra.mrb[0].mxu0 %v158
    %v868 = vpop.f32.mrb[0].mxu0
    %v869 = vadd.f32 %v185, %v868
    %v870 = vpop.f32.mrb[0].mxu0
    %871 = vmatprep.mubr.f32.mxu0 0.0
    %872 = vmatmul.mubr.f32.gmra.mrb[0].mxu0 %v159
    %v873 = vpop.f32.mrb[0].mxu0
    %v874 = vadd.f32 %v185, %v873
    %v875 = vpop.f32.mrb[0].mxu0
    %876 = vmatprep.mubr.f32.mxu0 0.0
    %877 = vmatmul.mubr.f32.gmra.mrb[0].mxu0 %v160
    %v878 = vpop.f32.mrb[0].mxu0
    %v879 = vadd.f32 %v185, %v878
    %v880 = vpop.f32.mrb[0].mxu0
    %881 = vmatprep.mubr.f32.mxu0 0.0
    %882 = vmatmul.mubr.f32.gmra.mrb[0].mxu0 %v161
    %v883 = vpop.f32.mrb[0].mxu0
    %v884 = vadd.f32 %v185, %v883
    %v885 = vpop.f32.mrb[0].mxu0
    %886 = vmatprep.mubr.f32.mxu0 0.0
    %887 = vmatmul.mubr.f32.gmra.mrb[0].mxu0 %v162
    %v888 = vpop.f32.mrb[0].mxu0
    %v889 = vadd.f32 %v185, %v888
    %v890 = vpop.f32.mrb[0].mxu0
    %891 = vdwg.mxu0
    %v892 = vmax.f32 %v254, 0.0
    %v893 = vmax.f32 %v259, 0.0
    %v894 = vmax.f32 %v264, 0.0
    %v895 = vmax.f32 %v269, 0.0
    %v896 = vmax.f32 %v274, 0.0
    %v897 = vmax.f32 %v279, 0.0
    %v898 = vmax.f32 %v284, 0.0
    %v899 = vmax.f32 %v289, 0.0
    %v900 = vmax.f32 %v294, 0.0
    %v901 = vmax.f32 %v299, 0.0
    %v902 = vmax.f32 %v304, 0.0
    %v903 = vmax.f32 %v309, 0.0
    %v904 = vmax.f32 %v314, 0.0
    %v905 = vmax.f32 %v319, 0.0
    %v906 = vmax.f32 %v324, 0.0
    %v907 = vmax.f32 %v329, 0.0
    %v908 = vmax.f32 %v334, 0.0
    %v909 = vmax.f32 %v339, 0.0
    %v910 = vmax.f32 %v344, 0.0
    %v911 = vmax.f32 %v349, 0.0
    %v912 = vmax.f32 %v354, 0.0
    %v913 = vmax.f32 %v359, 0.0
    %v914 = vmax.f32 %v364, 0.0
    %v915 = vmax.f32 %v369, 0.0
    %v916 = vmax.f32 %v374, 0.0
    %v917 = vmax.f32 %v379, 0.0
    %v918 = vmax.f32 %v384, 0.0
    %v919 = vmax.f32 %v389, 0.0
    %v920 = vmax.f32 %v394, 0.0
    %v921 = vmax.f32 %v399, 0.0
    %v922 = vmax.f32 %v404, 0.0
    %v923 = vmax.f32 %v409, 0.0
    %v924 = vmax.f32 %v414, 0.0
    %v925 = vmax.f32 %v419, 0.0
    %v926 = vmax.f32 %v424, 0.0
    %v927 = vmax.f32 %v429, 0.0
    %v928 = vmax.f32 %v434, 0.0
    %v929 = vmax.f32 %v439, 0.0
    %v930 = vmax.f32 %v444, 0.0
    %v931 = vmax.f32 %v449, 0.0
    %v932 = vmax.f32 %v454, 0.0
    %v933 = vmax.f32 %v459, 0.0
    %v934 = vmax.f32 %v464, 0.0
    %v935 = vmax.f32 %v469, 0.0
    %v936 = vmax.f32 %v474, 0.0
    %v937 = vmax.f32 %v479, 0.0
    %v938 = vmax.f32 %v484, 0.0
    %v939 = vmax.f32 %v489, 0.0
    %v940 = vmax.f32 %v494, 0.0
    %v941 = vmax.f32 %v499, 0.0
    %v942 = vmax.f32 %v504, 0.0
    %v943 = vmax.f32 %v509, 0.0
    %v944 = vmax.f32 %v514, 0.0
    %v945 = vmax.f32 %v519, 0.0
    %v946 = vmax.f32 %v524, 0.0
    %v947 = vmax.f32 %v529, 0.0
    %v948 = vmax.f32 %v534, 0.0
    %v949 = vmax.f32 %v539, 0.0
    %v950 = vmax.f32 %v544, 0.0
    %v951 = vmax.f32 %v549, 0.0
    %v952 = vmax.f32 %v554, 0.0
    %v953 = vmax.f32 %v559, 0.0
    %v954 = vmax.f32 %v564, 0.0
    %v955 = vmax.f32 %v569, 0.0
    %v956 = vmax.f32 %v574, 0.0
    %v957 = vmax.f32 %v579, 0.0
    %v958 = vmax.f32 %v584, 0.0
    %v959 = vmax.f32 %v589, 0.0
    %v960 = vmax.f32 %v594, 0.0
    %v961 = vmax.f32 %v599, 0.0
    %v962 = vmax.f32 %v604, 0.0
    %v963 = vmax.f32 %v609, 0.0
    %v964 = vmax.f32 %v614, 0.0
    %v965 = vmax.f32 %v619, 0.0
    %v966 = vmax.f32 %v624, 0.0
    %v967 = vmax.f32 %v629, 0.0
    %v968 = vmax.f32 %v634, 0.0
    %v969 = vmax.f32 %v639, 0.0
    %v970 = vmax.f32 %v644, 0.0
    %v971 = vmax.f32 %v649, 0.0
    %v972 = vmax.f32 %v654, 0.0
    %v973 = vmax.f32 %v659, 0.0
    %v974 = vmax.f32 %v664, 0.0
    %v975 = vmax.f32 %v669, 0.0
    %v976 = vmax.f32 %v674, 0.0
    %v977 = vmax.f32 %v679, 0.0
    %v978 = vmax.f32 %v684, 0.0
    %v979 = vmax.f32 %v689, 0.0
    %v980 = vmax.f32 %v694, 0.0
    %v981 = vmax.f32 %v699, 0.0
    %v982 = vmax.f32 %v704, 0.0
    %v983 = vmax.f32 %v709, 0.0
    %v984 = vmax.f32 %v714, 0.0
    %v985 = vmax.f32 %v719, 0.0
    %v986 = vmax.f32 %v724, 0.0
    %v987 = vmax.f32 %v729, 0.0
    %v988 = vmax.f32 %v734, 0.0
    %v989 = vmax.f32 %v739, 0.0
    %v990 = vmax.f32 %v744, 0.0
    %v991 = vmax.f32 %v749, 0.0
    %v992 = vmax.f32 %v754, 0.0
    %v993 = vmax.f32 %v759, 0.0
    %v994 = vmax.f32 %v764, 0.0
    %v995 = vmax.f32 %v769, 0.0
    %v996 = vmax.f32 %v774, 0.0
    %v997 = vmax.f32 %v779, 0.0
    %v998 = vmax.f32 %v784, 0.0
    %v999 = vmax.f32 %v789, 0.0
    %v1000 = vmax.f32 %v794, 0.0
    %v1001 = vmax.f32 %v799, 0.0
    %v1002 = vmax.f32 %v804, 0.0
    %v1003 = vmax.f32 %v809, 0.0
    %v1004 = vmax.f32 %v814, 0.0
    %v1005 = vmax.f32 %v819, 0.0
    %v1006 = vmax.f32 %v824, 0.0
    %v1007 = vmax.f32 %v829, 0.0
    %v1008 = vmax.f32 %v834, 0.0
    %v1009 = vmax.f32 %v839, 0.0
    %v1010 = vmax.f32 %v844, 0.0
    %v1011 = vmax.f32 %v849, 0.0
    %v1012 = vmax.f32 %v854, 0.0
    %v1013 = vmax.f32 %v859, 0.0
    %v1014 = vmax.f32 %v864, 0.0
    %v1015 = vmax.f32 %v869, 0.0
    %v1016 = vmax.f32 %v874, 0.0
    %v1017 = vmax.f32 %v879, 0.0
    %v1018 = vmax.f32 %v884, 0.0
    %v1019 = vmax.f32 %v889, 0.0
    %v1021 = vlaneseq
    %v1022 = vshrl.u32 %v1021, 7
    %v1023 = vsub.s32 0, %v1022
    %v1024 = vrot.slane %v180, %v1023
    %v1026 = vmul.f32 %v892, %v1024
    %v1027 = vmul.f32 %v893, %v1024
    %v1028 = vmul.f32 %v894, %v1024
    %v1029 = vmul.f32 %v895, %v1024
    %v1030 = vmul.f32 %v896, %v1024
    %v1031 = vmul.f32 %v897, %v1024
    %v1032 = vmul.f32 %v898, %v1024
    %v1033 = vmul.f32 %v899, %v1024
    %v1034 = vmul.f32 %v900, %v1024
    %v1035 = vmul.f32 %v901, %v1024
    %v1036 = vmul.f32 %v902, %v1024
    %v1037 = vmul.f32 %v903, %v1024
    %v1038 = vmul.f32 %v904, %v1024
    %v1039 = vmul.f32 %v905, %v1024
    %v1040 = vmul.f32 %v906, %v1024
    %v1041 = vmul.f32 %v907, %v1024
    %v1042 = vmul.f32 %v908, %v1024
    %v1043 = vmul.f32 %v909, %v1024
    %v1044 = vmul.f32 %v910, %v1024
    %v1045 = vmul.f32 %v911, %v1024
    %v1046 = vmul.f32 %v912, %v1024
    %v1047 = vmul.f32 %v913, %v1024
    %v1048 = vmul.f32 %v914, %v1024
    %v1049 = vmul.f32 %v915, %v1024
    %v1050 = vmul.f32 %v916, %v1024
    %v1051 = vmul.f32 %v917, %v1024
    %v1052 = vmul.f32 %v918, %v1024
    %v1053 = vmul.f32 %v919, %v1024
    %v1054 = vmul.f32 %v920, %v1024
    %v1055 = vmul.f32 %v921, %v1024
    %v1056 = vmul.f32 %v922, %v1024
    %v1057 = vmul.f32 %v923, %v1024
    %v1058 = vmul.f32 %v924, %v1024
    %v1059 = vmul.f32 %v925, %v1024
    %v1060 = vmul.f32 %v926, %v1024
    %v1061 = vmul.f32 %v927, %v1024
    %v1062 = vmul.f32 %v928, %v1024
    %v1063 = vmul.f32 %v929, %v1024
    %v1064 = vmul.f32 %v930, %v1024
    %v1065 = vmul.f32 %v931, %v1024
    %v1066 = vmul.f32 %v932, %v1024
    %v1067 = vmul.f32 %v933, %v1024
    %v1068 = vmul.f32 %v934, %v1024
    %v1069 = vmul.f32 %v935, %v1024
    %v1070 = vmul.f32 %v936, %v1024
    %v1071 = vmul.f32 %v937, %v1024
    %v1072 = vmul.f32 %v938, %v1024
    %v1073 = vmul.f32 %v939, %v1024
    %v1074 = vmul.f32 %v940, %v1024
    %v1075 = vmul.f32 %v941, %v1024
    %v1076 = vmul.f32 %v942, %v1024
    %v1077 = vmul.f32 %v943, %v1024
    %v1078 = vmul.f32 %v944, %v1024
    %v1079 = vmul.f32 %v945, %v1024
    %v1080 = vmul.f32 %v946, %v1024
    %v1081 = vmul.f32 %v947, %v1024
    %v1082 = vmul.f32 %v948, %v1024
    %v1083 = vmul.f32 %v949, %v1024
    %v1084 = vmul.f32 %v950, %v1024
    %v1085 = vmul.f32 %v951, %v1024
    %v1086 = vmul.f32 %v952, %v1024
    %v1087 = vmul.f32 %v953, %v1024
    %v1088 = vmul.f32 %v954, %v1024
    %v1089 = vmul.f32 %v955, %v1024
    %v1090 = vmul.f32 %v956, %v1024
    %v1091 = vmul.f32 %v957, %v1024
    %v1092 = vmul.f32 %v958, %v1024
    %v1093 = vmul.f32 %v959, %v1024
    %v1094 = vmul.f32 %v960, %v1024
    %v1095 = vmul.f32 %v961, %v1024
    %v1096 = vmul.f32 %v962, %v1024
    %v1097 = vmul.f32 %v963, %v1024
    %v1098 = vmul.f32 %v964, %v1024
    %v1099 = vmul.f32 %v965, %v1024
    %v1100 = vmul.f32 %v966, %v1024
    %v1101 = vmul.f32 %v967, %v1024
    %v1102 = vmul.f32 %v968, %v1024
    %v1103 = vmul.f32 %v969, %v1024
    %v1104 = vmul.f32 %v970, %v1024
    %v1105 = vmul.f32 %v971, %v1024
    %v1106 = vmul.f32 %v972, %v1024
    %v1107 = vmul.f32 %v973, %v1024
    %v1108 = vmul.f32 %v974, %v1024
    %v1109 = vmul.f32 %v975, %v1024
    %v1110 = vmul.f32 %v976, %v1024
    %v1111 = vmul.f32 %v977, %v1024
    %v1112 = vmul.f32 %v978, %v1024
    %v1113 = vmul.f32 %v979, %v1024
    %v1114 = vmul.f32 %v980, %v1024
    %v1115 = vmul.f32 %v981, %v1024
    %v1116 = vmul.f32 %v982, %v1024
    %v1117 = vmul.f32 %v983, %v1024
    %v1118 = vmul.f32 %v984, %v1024
    %v1119 = vmul.f32 %v985, %v1024
    %v1120 = vmul.f32 %v986, %v1024
    %v1121 = vmul.f32 %v987, %v1024
    %v1122 = vmul.f32 %v988, %v1024
    %v1123 = vmul.f32 %v989, %v1024
    %v1124 = vmul.f32 %v990, %v1024
    %v1125 = vmul.f32 %v991, %v1024
    %v1126 = vmul.f32 %v992, %v1024
    %v1127 = vmul.f32 %v993, %v1024
    %v1128 = vmul.f32 %v994, %v1024
    %v1129 = vmul.f32 %v995, %v1024
    %v1130 = vmul.f32 %v996, %v1024
    %v1131 = vmul.f32 %v997, %v1024
    %v1132 = vmul.f32 %v998, %v1024
    %v1133 = vmul.f32 %v999, %v1024
    %v1134 = vmul.f32 %v1000, %v1024
    %v1135 = vmul.f32 %v1001, %v1024
    %v1136 = vmul.f32 %v1002, %v1024
    %v1137 = vmul.f32 %v1003, %v1024
    %v1138 = vmul.f32 %v1004, %v1024
    %v1139 = vmul.f32 %v1005, %v1024
    %v1140 = vmul.f32 %v1006, %v1024
    %v1141 = vmul.f32 %v1007, %v1024
    %v1142 = vmul.f32 %v1008, %v1024
    %v1143 = vmul.f32 %v1009, %v1024
    %v1144 = vmul.f32 %v1010, %v1024
    %v1145 = vmul.f32 %v1011, %v1024
    %v1146 = vmul.f32 %v1012, %v1024
    %v1147 = vmul.f32 %v1013, %v1024
    %v1148 = vmul.f32 %v1014, %v1024
    %v1149 = vmul.f32 %v1015, %v1024
    %v1150 = vmul.f32 %v1016, %v1024
    %v1151 = vmul.f32 %v1017, %v1024
    %v1152 = vmul.f32 %v1018, %v1024
    %v1153 = vmul.f32 %v1019, %v1024
    %vm1154 = vcmask 523264
    %v1155 = vsel %vm1154, %v1026, 0.0
    %1156 = vadd.xlane.f32.xlu0 %v1155
    %v1157 = vpop.xlane.xlu0 %1156
    %v1158 = vsel %vm1154, %v1027, 0.0
    %1159 = vadd.xlane.f32.xlu0 %v1158
    %v1160 = vpop.xlane.xlu0 %1159
    %v1161 = vsel %vm1154, %v1028, 0.0
    %1162 = vadd.xlane.f32.xlu0 %v1161
    %v1163 = vpop.xlane.xlu0 %1162
    %v1164 = vsel %vm1154, %v1029, 0.0
    %1165 = vadd.xlane.f32.xlu0 %v1164
    %v1166 = vpop.xlane.xlu0 %1165
    %v1167 = vsel %vm1154, %v1030, 0.0
    %1168 = vadd.xlane.f32.xlu0 %v1167
    %v1169 = vpop.xlane.xlu0 %1168
    %v1170 = vsel %vm1154, %v1031, 0.0
    %1171 = vadd.xlane.f32.xlu0 %v1170
    %v1172 = vpop.xlane.xlu0 %1171
    %v1173 = vsel %vm1154, %v1032, 0.0
    %1174 = vadd.xlane.f32.xlu0 %v1173
    %v1175 = vpop.xlane.xlu0 %1174
    %v1176 = vsel %vm1154, %v1033, 0.0
    %1177 = vadd.xlane.f32.xlu0 %v1176
    %v1178 = vpop.xlane.xlu0 %1177
    %v1179 = vsel %vm1154, %v1034, 0.0
    %1180 = vadd.xlane.f32.xlu0 %v1179
    %v1181 = vpop.xlane.xlu0 %1180
    %v1182 = vsel %vm1154, %v1035, 0.0
    %1183 = vadd.xlane.f32.xlu0 %v1182
    %v1184 = vpop.xlane.xlu0 %1183
    %v1185 = vsel %vm1154, %v1036, 0.0
    %1186 = vadd.xlane.f32.xlu0 %v1185
    %v1187 = vpop.xlane.xlu0 %1186
    %v1188 = vsel %vm1154, %v1037, 0.0
    %1189 = vadd.xlane.f32.xlu0 %v1188
    %v1190 = vpop.xlane.xlu0 %1189
    %v1191 = vsel %vm1154, %v1038, 0.0
    %1192 = vadd.xlane.f32.xlu0 %v1191
    %v1193 = vpop.xlane.xlu0 %1192
    %v1194 = vsel %vm1154, %v1039, 0.0
    %1195 = vadd.xlane.f32.xlu0 %v1194
    %v1196 = vpop.xlane.xlu0 %1195
    %v1197 = vsel %vm1154, %v1040, 0.0
    %1198 = vadd.xlane.f32.xlu0 %v1197
    %v1199 = vpop.xlane.xlu0 %1198
    %v1200 = vsel %vm1154, %v1041, 0.0
    %1201 = vadd.xlane.f32.xlu0 %v1200
    %v1202 = vpop.xlane.xlu0 %1201
    %v1203 = vsel %vm1154, %v1042, 0.0
    %1204 = vadd.xlane.f32.xlu0 %v1203
    %v1205 = vpop.xlane.xlu0 %1204
    %v1206 = vsel %vm1154, %v1043, 0.0
    %1207 = vadd.xlane.f32.xlu0 %v1206
    %v1208 = vpop.xlane.xlu0 %1207
    %v1209 = vsel %vm1154, %v1044, 0.0
    %1210 = vadd.xlane.f32.xlu0 %v1209
    %v1211 = vpop.xlane.xlu0 %1210
    %v1212 = vsel %vm1154, %v1045, 0.0
    %1213 = vadd.xlane.f32.xlu0 %v1212
    %v1214 = vpop.xlane.xlu0 %1213
    %v1215 = vsel %vm1154, %v1046, 0.0
    %1216 = vadd.xlane.f32.xlu0 %v1215
    %v1217 = vpop.xlane.xlu0 %1216
    %v1218 = vsel %vm1154, %v1047, 0.0
    %1219 = vadd.xlane.f32.xlu0 %v1218
    %v1220 = vpop.xlane.xlu0 %1219
    %v1221 = vsel %vm1154, %v1048, 0.0
    %1222 = vadd.xlane.f32.xlu0 %v1221
    %v1223 = vpop.xlane.xlu0 %1222
    %v1224 = vsel %vm1154, %v1049, 0.0
    %1225 = vadd.xlane.f32.xlu0 %v1224
    %v1226 = vpop.xlane.xlu0 %1225
    %v1227 = vsel %vm1154, %v1050, 0.0
    %1228 = vadd.xlane.f32.xlu0 %v1227
    %v1229 = vpop.xlane.xlu0 %1228
    %v1230 = vsel %vm1154, %v1051, 0.0
    %1231 = vadd.xlane.f32.xlu0 %v1230
    %v1232 = vpop.xlane.xlu0 %1231
    %v1233 = vsel %vm1154, %v1052, 0.0
    %1234 = vadd.xlane.f32.xlu0 %v1233
    %v1235 = vpop.xlane.xlu0 %1234
    %v1236 = vsel %vm1154, %v1053, 0.0
    %1237 = vadd.xlane.f32.xlu0 %v1236
    %v1238 = vpop.xlane.xlu0 %1237
    %v1239 = vsel %vm1154, %v1054, 0.0
    %1240 = vadd.xlane.f32.xlu0 %v1239
    %v1241 = vpop.xlane.xlu0 %1240
    %v1242 = vsel %vm1154, %v1055, 0.0
    %1243 = vadd.xlane.f32.xlu0 %v1242
    %v1244 = vpop.xlane.xlu0 %1243
    %v1245 = vsel %vm1154, %v1056, 0.0
    %1246 = vadd.xlane.f32.xlu0 %v1245
    %v1247 = vpop.xlane.xlu0 %1246
    %v1248 = vsel %vm1154, %v1057, 0.0
    %1249 = vadd.xlane.f32.xlu0 %v1248
    %v1250 = vpop.xlane.xlu0 %1249
    %v1251 = vsel %vm1154, %v1058, 0.0
    %1252 = vadd.xlane.f32.xlu0 %v1251
    %v1253 = vpop.xlane.xlu0 %1252
    %v1254 = vsel %vm1154, %v1059, 0.0
    %1255 = vadd.xlane.f32.xlu0 %v1254
    %v1256 = vpop.xlane.xlu0 %1255
    %v1257 = vsel %vm1154, %v1060, 0.0
    %1258 = vadd.xlane.f32.xlu0 %v1257
    %v1259 = vpop.xlane.xlu0 %1258
    %v1260 = vsel %vm1154, %v1061, 0.0
    %1261 = vadd.xlane.f32.xlu0 %v1260
    %v1262 = vpop.xlane.xlu0 %1261
    %v1263 = vsel %vm1154, %v1062, 0.0
    %1264 = vadd.xlane.f32.xlu0 %v1263
    %v1265 = vpop.xlane.xlu0 %1264
    %v1266 = vsel %vm1154, %v1063, 0.0
    %1267 = vadd.xlane.f32.xlu0 %v1266
    %v1268 = vpop.xlane.xlu0 %1267
    %v1269 = vsel %vm1154, %v1064, 0.0
    %1270 = vadd.xlane.f32.xlu0 %v1269
    %v1271 = vpop.xlane.xlu0 %1270
    %v1272 = vsel %vm1154, %v1065, 0.0
    %1273 = vadd.xlane.f32.xlu0 %v1272
    %v1274 = vpop.xlane.xlu0 %1273
    %v1275 = vsel %vm1154, %v1066, 0.0
    %1276 = vadd.xlane.f32.xlu0 %v1275
    %v1277 = vpop.xlane.xlu0 %1276
    %v1278 = vsel %vm1154, %v1067, 0.0
    %1279 = vadd.xlane.f32.xlu0 %v1278
    %v1280 = vpop.xlane.xlu0 %1279
    %v1281 = vsel %vm1154, %v1068, 0.0
    %1282 = vadd.xlane.f32.xlu0 %v1281
    %v1283 = vpop.xlane.xlu0 %1282
    %v1284 = vsel %vm1154, %v1069, 0.0
    %1285 = vadd.xlane.f32.xlu0 %v1284
    %v1286 = vpop.xlane.xlu0 %1285
    %v1287 = vsel %vm1154, %v1070, 0.0
    %1288 = vadd.xlane.f32.xlu0 %v1287
    %v1289 = vpop.xlane.xlu0 %1288
    %v1290 = vsel %vm1154, %v1071, 0.0
    %1291 = vadd.xlane.f32.xlu0 %v1290
    %v1292 = vpop.xlane.xlu0 %1291
    %v1293 = vsel %vm1154, %v1072, 0.0
    %1294 = vadd.xlane.f32.xlu0 %v1293
    %v1295 = vpop.xlane.xlu0 %1294
    %v1296 = vsel %vm1154, %v1073, 0.0
    %1297 = vadd.xlane.f32.xlu0 %v1296
    %v1298 = vpop.xlane.xlu0 %1297
    %v1299 = vsel %vm1154, %v1074, 0.0
    %1300 = vadd.xlane.f32.xlu0 %v1299
    %v1301 = vpop.xlane.xlu0 %1300
    %v1302 = vsel %vm1154, %v1075, 0.0
    %1303 = vadd.xlane.f32.xlu0 %v1302
    %v1304 = vpop.xlane.xlu0 %1303
    %v1305 = vsel %vm1154, %v1076, 0.0
    %1306 = vadd.xlane.f32.xlu0 %v1305
    %v1307 = vpop.xlane.xlu0 %1306
    %v1308 = vsel %vm1154, %v1077, 0.0
    %1309 = vadd.xlane.f32.xlu0 %v1308
    %v1310 = vpop.xlane.xlu0 %1309
    %v1311 = vsel %vm1154, %v1078, 0.0
    %1312 = vadd.xlane.f32.xlu0 %v1311
    %v1313 = vpop.xlane.xlu0 %1312
    %v1314 = vsel %vm1154, %v1079, 0.0
    %1315 = vadd.xlane.f32.xlu0 %v1314
    %v1316 = vpop.xlane.xlu0 %1315
    %v1317 = vsel %vm1154, %v1080, 0.0
    %1318 = vadd.xlane.f32.xlu0 %v1317
    %v1319 = vpop.xlane.xlu0 %1318
    %v1320 = vsel %vm1154, %v1081, 0.0
    %1321 = vadd.xlane.f32.xlu0 %v1320
    %v1322 = vpop.xlane.xlu0 %1321
    %v1323 = vsel %vm1154, %v1082, 0.0
    %1324 = vadd.xlane.f32.xlu0 %v1323
    %v1325 = vpop.xlane.xlu0 %1324
    %v1326 = vsel %vm1154, %v1083, 0.0
    %1327 = vadd.xlane.f32.xlu0 %v1326
    %v1328 = vpop.xlane.xlu0 %1327
    %v1329 = vsel %vm1154, %v1084, 0.0
    %1330 = vadd.xlane.f32.xlu0 %v1329
    %v1331 = vpop.xlane.xlu0 %1330
    %v1332 = vsel %vm1154, %v1085, 0.0
    %1333 = vadd.xlane.f32.xlu0 %v1332
    %v1334 = vpop.xlane.xlu0 %1333
    %v1335 = vsel %vm1154, %v1086, 0.0
    %1336 = vadd.xlane.f32.xlu0 %v1335
    %v1337 = vpop.xlane.xlu0 %1336
    %v1338 = vsel %vm1154, %v1087, 0.0
    %1339 = vadd.xlane.f32.xlu0 %v1338
    %v1340 = vpop.xlane.xlu0 %1339
    %v1341 = vsel %vm1154, %v1088, 0.0
    %1342 = vadd.xlane.f32.xlu0 %v1341
    %v1343 = vpop.xlane.xlu0 %1342
    %v1344 = vsel %vm1154, %v1089, 0.0
    %1345 = vadd.xlane.f32.xlu0 %v1344
    %v1346 = vpop.xlane.xlu0 %1345
    %v1347 = vsel %vm1154, %v1090, 0.0
    %1348 = vadd.xlane.f32.xlu0 %v1347
    %v1349 = vpop.xlane.xlu0 %1348
    %v1350 = vsel %vm1154, %v1091, 0.0
    %1351 = vadd.xlane.f32.xlu0 %v1350
    %v1352 = vpop.xlane.xlu0 %1351
    %v1353 = vsel %vm1154, %v1092, 0.0
    %1354 = vadd.xlane.f32.xlu0 %v1353
    %v1355 = vpop.xlane.xlu0 %1354
    %v1356 = vsel %vm1154, %v1093, 0.0
    %1357 = vadd.xlane.f32.xlu0 %v1356
    %v1358 = vpop.xlane.xlu0 %1357
    %v1359 = vsel %vm1154, %v1094, 0.0
    %1360 = vadd.xlane.f32.xlu0 %v1359
    %v1361 = vpop.xlane.xlu0 %1360
    %v1362 = vsel %vm1154, %v1095, 0.0
    %1363 = vadd.xlane.f32.xlu0 %v1362
    %v1364 = vpop.xlane.xlu0 %1363
    %v1365 = vsel %vm1154, %v1096, 0.0
    %1366 = vadd.xlane.f32.xlu0 %v1365
    %v1367 = vpop.xlane.xlu0 %1366
    %v1368 = vsel %vm1154, %v1097, 0.0
    %1369 = vadd.xlane.f32.xlu0 %v1368
    %v1370 = vpop.xlane.xlu0 %1369
    %v1371 = vsel %vm1154, %v1098, 0.0
    %1372 = vadd.xlane.f32.xlu0 %v1371
    %v1373 = vpop.xlane.xlu0 %1372
    %v1374 = vsel %vm1154, %v1099, 0.0
    %1375 = vadd.xlane.f32.xlu0 %v1374
    %v1376 = vpop.xlane.xlu0 %1375
    %v1377 = vsel %vm1154, %v1100, 0.0
    %1378 = vadd.xlane.f32.xlu0 %v1377
    %v1379 = vpop.xlane.xlu0 %1378
    %v1380 = vsel %vm1154, %v1101, 0.0
    %1381 = vadd.xlane.f32.xlu0 %v1380
    %v1382 = vpop.xlane.xlu0 %1381
    %v1383 = vsel %vm1154, %v1102, 0.0
    %1384 = vadd.xlane.f32.xlu0 %v1383
    %v1385 = vpop.xlane.xlu0 %1384
    %v1386 = vsel %vm1154, %v1103, 0.0
    %1387 = vadd.xlane.f32.xlu0 %v1386
    %v1388 = vpop.xlane.xlu0 %1387
    %v1389 = vsel %vm1154, %v1104, 0.0
    %1390 = vadd.xlane.f32.xlu0 %v1389
    %v1391 = vpop.xlane.xlu0 %1390
    %v1392 = vsel %vm1154, %v1105, 0.0
    %1393 = vadd.xlane.f32.xlu0 %v1392
    %v1394 = vpop.xlane.xlu0 %1393
    %v1395 = vsel %vm1154, %v1106, 0.0
    %1396 = vadd.xlane.f32.xlu0 %v1395
    %v1397 = vpop.xlane.xlu0 %1396
    %v1398 = vsel %vm1154, %v1107, 0.0
    %1399 = vadd.xlane.f32.xlu0 %v1398
    %v1400 = vpop.xlane.xlu0 %1399
    %v1401 = vsel %vm1154, %v1108, 0.0
    %1402 = vadd.xlane.f32.xlu0 %v1401
    %v1403 = vpop.xlane.xlu0 %1402
    %v1404 = vsel %vm1154, %v1109, 0.0
    %1405 = vadd.xlane.f32.xlu0 %v1404
    %v1406 = vpop.xlane.xlu0 %1405
    %v1407 = vsel %vm1154, %v1110, 0.0
    %1408 = vadd.xlane.f32.xlu0 %v1407
    %v1409 = vpop.xlane.xlu0 %1408
    %v1410 = vsel %vm1154, %v1111, 0.0
    %1411 = vadd.xlane.f32.xlu0 %v1410
    %v1412 = vpop.xlane.xlu0 %1411
    %v1413 = vsel %vm1154, %v1112, 0.0
    %1414 = vadd.xlane.f32.xlu0 %v1413
    %v1415 = vpop.xlane.xlu0 %1414
    %v1416 = vsel %vm1154, %v1113, 0.0
    %1417 = vadd.xlane.f32.xlu0 %v1416
    %v1418 = vpop.xlane.xlu0 %1417
    %v1419 = vsel %vm1154, %v1114, 0.0
    %1420 = vadd.xlane.f32.xlu0 %v1419
    %v1421 = vpop.xlane.xlu0 %1420
    %v1422 = vsel %vm1154, %v1115, 0.0
    %1423 = vadd.xlane.f32.xlu0 %v1422
    %v1424 = vpop.xlane.xlu0 %1423
    %v1425 = vsel %vm1154, %v1116, 0.0
    %1426 = vadd.xlane.f32.xlu0 %v1425
    %v1427 = vpop.xlane.xlu0 %1426
    %v1428 = vsel %vm1154, %v1117, 0.0
    %1429 = vadd.xlane.f32.xlu0 %v1428
    %v1430 = vpop.xlane.xlu0 %1429
    %v1431 = vsel %vm1154, %v1118, 0.0
    %1432 = vadd.xlane.f32.xlu0 %v1431
    %v1433 = vpop.xlane.xlu0 %1432
    %v1434 = vsel %vm1154, %v1119, 0.0
    %1435 = vadd.xlane.f32.xlu0 %v1434
    %v1436 = vpop.xlane.xlu0 %1435
    %v1437 = vsel %vm1154, %v1120, 0.0
    %1438 = vadd.xlane.f32.xlu0 %v1437
    %v1439 = vpop.xlane.xlu0 %1438
    %v1440 = vsel %vm1154, %v1121, 0.0
    %1441 = vadd.xlane.f32.xlu0 %v1440
    %v1442 = vpop.xlane.xlu0 %1441
    %v1443 = vsel %vm1154, %v1122, 0.0
    %1444 = vadd.xlane.f32.xlu0 %v1443
    %v1445 = vpop.xlane.xlu0 %1444
    %v1446 = vsel %vm1154, %v1123, 0.0
    %1447 = vadd.xlane.f32.xlu0 %v1446
    %v1448 = vpop.xlane.xlu0 %1447
    %v1449 = vsel %vm1154, %v1124, 0.0
    %1450 = vadd.xlane.f32.xlu0 %v1449
    %v1451 = vpop.xlane.xlu0 %1450
    %v1452 = vsel %vm1154, %v1125, 0.0
    %1453 = vadd.xlane.f32.xlu0 %v1452
    %v1454 = vpop.xlane.xlu0 %1453
    %v1455 = vsel %vm1154, %v1126, 0.0
    %1456 = vadd.xlane.f32.xlu0 %v1455
    %v1457 = vpop.xlane.xlu0 %1456
    %v1458 = vsel %vm1154, %v1127, 0.0
    %1459 = vadd.xlane.f32.xlu0 %v1458
    %v1460 = vpop.xlane.xlu0 %1459
    %v1461 = vsel %vm1154, %v1128, 0.0
    %1462 = vadd.xlane.f32.xlu0 %v1461
    %v1463 = vpop.xlane.xlu0 %1462
    %v1464 = vsel %vm1154, %v1129, 0.0
    %1465 = vadd.xlane.f32.xlu0 %v1464
    %v1466 = vpop.xlane.xlu0 %1465
    %v1467 = vsel %vm1154, %v1130, 0.0
    %1468 = vadd.xlane.f32.xlu0 %v1467
    %v1469 = vpop.xlane.xlu0 %1468
    %v1470 = vsel %vm1154, %v1131, 0.0
    %1471 = vadd.xlane.f32.xlu0 %v1470
    %v1472 = vpop.xlane.xlu0 %1471
    %v1473 = vsel %vm1154, %v1132, 0.0
    %1474 = vadd.xlane.f32.xlu0 %v1473
    %v1475 = vpop.xlane.xlu0 %1474
    %v1476 = vsel %vm1154, %v1133, 0.0
    %1477 = vadd.xlane.f32.xlu0 %v1476
    %v1478 = vpop.xlane.xlu0 %1477
    %v1479 = vsel %vm1154, %v1134, 0.0
    %1480 = vadd.xlane.f32.xlu0 %v1479
    %v1481 = vpop.xlane.xlu0 %1480
    %v1482 = vsel %vm1154, %v1135, 0.0
    %1483 = vadd.xlane.f32.xlu0 %v1482
    %v1484 = vpop.xlane.xlu0 %1483
    %v1485 = vsel %vm1154, %v1136, 0.0
    %1486 = vadd.xlane.f32.xlu0 %v1485
    %v1487 = vpop.xlane.xlu0 %1486
    %v1488 = vsel %vm1154, %v1137, 0.0
    %1489 = vadd.xlane.f32.xlu0 %v1488
    %v1490 = vpop.xlane.xlu0 %1489
    %v1491 = vsel %vm1154, %v1138, 0.0
    %1492 = vadd.xlane.f32.xlu0 %v1491
    %v1493 = vpop.xlane.xlu0 %1492
    %v1494 = vsel %vm1154, %v1139, 0.0
    %1495 = vadd.xlane.f32.xlu0 %v1494
    %v1496 = vpop.xlane.xlu0 %1495
    %v1497 = vsel %vm1154, %v1140, 0.0
    %1498 = vadd.xlane.f32.xlu0 %v1497
    %v1499 = vpop.xlane.xlu0 %1498
    %v1500 = vsel %vm1154, %v1141, 0.0
    %1501 = vadd.xlane.f32.xlu0 %v1500
    %v1502 = vpop.xlane.xlu0 %1501
    %v1503 = vsel %vm1154, %v1142, 0.0
    %1504 = vadd.xlane.f32.xlu0 %v1503
    %v1505 = vpop.xlane.xlu0 %1504
    %v1506 = vsel %vm1154, %v1143, 0.0
    %1507 = vadd.xlane.f32.xlu0 %v1506
    %v1508 = vpop.xlane.xlu0 %1507
    %v1509 = vsel %vm1154, %v1144, 0.0
    %1510 = vadd.xlane.f32.xlu0 %v1509
    %v1511 = vpop.xlane.xlu0 %1510
    %v1512 = vsel %vm1154, %v1145, 0.0
    %1513 = vadd.xlane.f32.xlu0 %v1512
    %v1514 = vpop.xlane.xlu0 %1513
    %v1515 = vsel %vm1154, %v1146, 0.0
    %1516 = vadd.xlane.f32.xlu0 %v1515
    %v1517 = vpop.xlane.xlu0 %1516
    %v1518 = vsel %vm1154, %v1147, 0.0
    %1519 = vadd.xlane.f32.xlu0 %v1518
    %v1520 = vpop.xlane.xlu0 %1519
    %v1521 = vsel %vm1154, %v1148, 0.0
    %1522 = vadd.xlane.f32.xlu0 %v1521
    %v1523 = vpop.xlane.xlu0 %1522
    %v1524 = vsel %vm1154, %v1149, 0.0
    %1525 = vadd.xlane.f32.xlu0 %v1524
    %v1526 = vpop.xlane.xlu0 %1525
    %v1527 = vsel %vm1154, %v1150, 0.0
    %1528 = vadd.xlane.f32.xlu0 %v1527
    %v1529 = vpop.xlane.xlu0 %1528
    %v1530 = vsel %vm1154, %v1151, 0.0
    %1531 = vadd.xlane.f32.xlu0 %v1530
    %v1532 = vpop.xlane.xlu0 %1531
    %v1533 = vsel %vm1154, %v1152, 0.0
    %1534 = vadd.xlane.f32.xlu0 %v1533
    %v1535 = vpop.xlane.xlu0 %1534
    %v1536 = vsel %vm1154, %v1153, 0.0
    %1537 = vadd.xlane.f32.xlu0 %v1536
    %v1538 = vpop.xlane.xlu0 %1537
    %v1539 = vlaneseq
    %v1540 = vand.u32 %v1539, 127
    %vm1541 = vcmp.lt.s32.totalorder %v1540, 8
    %v1670 = vlaneseq
    %v1671 = vshrl.u32 %v1670, 7
    %v1672 = vsub.s32 %v1540, %v1671
    %v1673 = vrot.slane %v1157, %v1672
    %v1674 = vadd.s32 %v1540, 4294967288
    %v1675 = vlaneseq
    %v1676 = vshrl.u32 %v1675, 7
    %v1677 = vsub.s32 %v1674, %v1676
    %v1678 = vrot.slane %v1160, %v1677
    %vm1679 = vcmask 130112
    %v1680 = vsel %vm1679, %v1678, %v1673
    %v1681 = vadd.s32 %v1540, 4294967280
    %v1682 = vlaneseq
    %v1683 = vshrl.u32 %v1682, 7
    %v1684 = vsub.s32 %v1681, %v1683
    %v1685 = vrot.slane %v1163, %v1684
    %vm1686 = vcmask 195712
    %v1687 = vsel %vm1686, %v1685, %v1680
    %v1688 = vadd.s32 %v1540, 4294967272
    %v1689 = vlaneseq
    %v1690 = vshrl.u32 %v1689, 7
    %v1691 = vsub.s32 %v1688, %v1690
    %v1692 = vrot.slane %v1166, %v1691
    %vm1693 = vcmask 261312
    %v1694 = vsel %vm1693, %v1692, %v1687
    %v1695 = vadd.s32 %v1540, 4294967264
    %v1696 = vlaneseq
    %v1697 = vshrl.u32 %v1696, 7
    %v1698 = vsub.s32 %v1695, %v1697
    %v1699 = vrot.slane %v1169, %v1698
    %vm1700 = vcmask 326912
    %v1701 = vsel %vm1700, %v1699, %v1694
    %v1702 = vadd.s32 %v1540, 4294967256
    %v1703 = vlaneseq
    %v1704 = vshrl.u32 %v1703, 7
    %v1705 = vsub.s32 %v1702, %v1704
    %v1706 = vrot.slane %v1172, %v1705
    %vm1707 = vcmask 392512
    %v1708 = vsel %vm1707, %v1706, %v1701
    %v1709 = vadd.s32 %v1540, 4294967248
    %v1710 = vlaneseq
    %v1711 = vshrl.u32 %v1710, 7
    %v1712 = vsub.s32 %v1709, %v1711
    %v1713 = vrot.slane %v1175, %v1712
    %vm1714 = vcmask 458112
    %v1715 = vsel %vm1714, %v1713, %v1708
    %v1716 = vadd.s32 %v1540, 4294967240
    %v1717 = vlaneseq
    %v1718 = vshrl.u32 %v1717, 7
    %v1719 = vsub.s32 %v1716, %v1718
    %v1720 = vrot.slane %v1178, %v1719
    %vm1721 = vcmask 523712
    %v1722 = vsel %vm1721, %v1720, %v1715
    %v1723 = vadd.s32 %v1540, 4294967232
    %v1724 = vlaneseq
    %v1725 = vshrl.u32 %v1724, 7
    %v1726 = vsub.s32 %v1723, %v1725
    %v1727 = vrot.slane %v1181, %v1726
    %vm1728 = vcmask 589312
    %v1729 = vsel %vm1728, %v1727, %v1722
    %v1730 = vadd.s32 %v1540, 4294967224
    %v1731 = vlaneseq
    %v1732 = vshrl.u32 %v1731, 7
    %v1733 = vsub.s32 %v1730, %v1732
    %v1734 = vrot.slane %v1184, %v1733
    %vm1735 = vcmask 654912
    %v1736 = vsel %vm1735, %v1734, %v1729
    %v1737 = vadd.s32 %v1540, 4294967216
    %v1738 = vlaneseq
    %v1739 = vshrl.u32 %v1738, 7
    %v1740 = vsub.s32 %v1737, %v1739
    %v1741 = vrot.slane %v1187, %v1740
    %vm1742 = vcmask 720512
    %v1743 = vsel %vm1742, %v1741, %v1736
    %v1744 = vadd.s32 %v1540, 4294967208
    %v1745 = vlaneseq
    %v1746 = vshrl.u32 %v1745, 7
    %v1747 = vsub.s32 %v1744, %v1746
    %v1748 = vrot.slane %v1190, %v1747
    %vm1749 = vcmask 786112
    %v1750 = vsel %vm1749, %v1748, %v1743
    %v1751 = vadd.s32 %v1540, 4294967200
    %v1752 = vlaneseq
    %v1753 = vshrl.u32 %v1752, 7
    %v1754 = vsub.s32 %v1751, %v1753
    %v1755 = vrot.slane %v1193, %v1754
    %vm1756 = vcmask 851712
    %v1757 = vsel %vm1756, %v1755, %v1750
    %v1758 = vadd.s32 %v1540, 4294967192
    %v1759 = vlaneseq
    %v1760 = vshrl.u32 %v1759, 7
    %v1761 = vsub.s32 %v1758, %v1760
    %v1762 = vrot.slane %v1196, %v1761
    %vm1763 = vcmask 917312
    %v1764 = vsel %vm1763, %v1762, %v1757
    %v1765 = vadd.s32 %v1540, 4294967184
    %v1766 = vlaneseq
    %v1767 = vshrl.u32 %v1766, 7
    %v1768 = vsub.s32 %v1765, %v1767
    %v1769 = vrot.slane %v1199, %v1768
    %vm1770 = vcmask 982912
    %v1771 = vsel %vm1770, %v1769, %v1764
    %v1772 = vadd.s32 %v1540, 4294967176
    %v1773 = vlaneseq
    %v1774 = vshrl.u32 %v1773, 7
    %v1775 = vsub.s32 %v1772, %v1774
    %v1776 = vrot.slane %v1202, %v1775
    %vm1777 = vcmask 1048512
    %v1778 = vsel %vm1777, %v1776, %v1771
    %v1779 = vlaneseq
    %v1780 = vshrl.u32 %v1779, 7
    %v1781 = vsub.s32 %v1540, %v1780
    %v1782 = vrot.slane %v1205, %v1781
    %v1783 = vlaneseq
    %v1784 = vshrl.u32 %v1783, 7
    %v1785 = vsub.s32 %v1674, %v1784
    %v1786 = vrot.slane %v1208, %v1785
    %v1787 = vsel %vm1679, %v1786, %v1782
    %v1788 = vlaneseq
    %v1789 = vshrl.u32 %v1788, 7
    %v1790 = vsub.s32 %v1681, %v1789
    %v1791 = vrot.slane %v1211, %v1790
    %v1792 = vsel %vm1686, %v1791, %v1787
    %v1793 = vlaneseq
    %v1794 = vshrl.u32 %v1793, 7
    %v1795 = vsub.s32 %v1688, %v1794
    %v1796 = vrot.slane %v1214, %v1795
    %v1797 = vsel %vm1693, %v1796, %v1792
    %v1798 = vlaneseq
    %v1799 = vshrl.u32 %v1798, 7
    %v1800 = vsub.s32 %v1695, %v1799
    %v1801 = vrot.slane %v1217, %v1800
    %v1802 = vsel %vm1700, %v1801, %v1797
    %v1803 = vlaneseq
    %v1804 = vshrl.u32 %v1803, 7
    %v1805 = vsub.s32 %v1702, %v1804
    %v1806 = vrot.slane %v1220, %v1805
    %v1807 = vsel %vm1707, %v1806, %v1802
    %v1808 = vlaneseq
    %v1809 = vshrl.u32 %v1808, 7
    %v1810 = vsub.s32 %v1709, %v1809
    %v1811 = vrot.slane %v1223, %v1810
    %v1812 = vsel %vm1714, %v1811, %v1807
    %v1813 = vlaneseq
    %v1814 = vshrl.u32 %v1813, 7
    %v1815 = vsub.s32 %v1716, %v1814
    %v1816 = vrot.slane %v1226, %v1815
    %v1817 = vsel %vm1721, %v1816, %v1812
    %v1818 = vlaneseq
    %v1819 = vshrl.u32 %v1818, 7
    %v1820 = vsub.s32 %v1723, %v1819
    %v1821 = vrot.slane %v1229, %v1820
    %v1822 = vsel %vm1728, %v1821, %v1817
    %v1823 = vlaneseq
    %v1824 = vshrl.u32 %v1823, 7
    %v1825 = vsub.s32 %v1730, %v1824
    %v1826 = vrot.slane %v1232, %v1825
    %v1827 = vsel %vm1735, %v1826, %v1822
    %v1828 = vlaneseq
    %v1829 = vshrl.u32 %v1828, 7
    %v1830 = vsub.s32 %v1737, %v1829
    %v1831 = vrot.slane %v1235, %v1830
    %v1832 = vsel %vm1742, %v1831, %v1827
    %v1833 = vlaneseq
    %v1834 = vshrl.u32 %v1833, 7
    %v1835 = vsub.s32 %v1744, %v1834
    %v1836 = vrot.slane %v1238, %v1835
    %v1837 = vsel %vm1749, %v1836, %v1832
    %v1838 = vlaneseq
    %v1839 = vshrl.u32 %v1838, 7
    %v1840 = vsub.s32 %v1751, %v1839
    %v1841 = vrot.slane %v1241, %v1840
    %v1842 = vsel %vm1756, %v1841, %v1837
    %v1843 = vlaneseq
    %v1844 = vshrl.u32 %v1843, 7
    %v1845 = vsub.s32 %v1758, %v1844
    %v1846 = vrot.slane %v1244, %v1845
    %v1847 = vsel %vm1763, %v1846, %v1842
    %v1848 = vlaneseq
    %v1849 = vshrl.u32 %v1848, 7
    %v1850 = vsub.s32 %v1765, %v1849
    %v1851 = vrot.slane %v1247, %v1850
    %v1852 = vsel %vm1770, %v1851, %v1847
    %v1853 = vlaneseq
    %v1854 = vshrl.u32 %v1853, 7
    %v1855 = vsub.s32 %v1772, %v1854
    %v1856 = vrot.slane %v1250, %v1855
    %v1857 = vsel %vm1777, %v1856, %v1852
    %v1858 = vlaneseq
    %v1859 = vshrl.u32 %v1858, 7
    %v1860 = vsub.s32 %v1540, %v1859
    %v1861 = vrot.slane %v1253, %v1860
    %v1862 = vlaneseq
    %v1863 = vshrl.u32 %v1862, 7
    %v1864 = vsub.s32 %v1674, %v1863
    %v1865 = vrot.slane %v1256, %v1864
    %v1866 = vsel %vm1679, %v1865, %v1861
    %v1867 = vlaneseq
    %v1868 = vshrl.u32 %v1867, 7
    %v1869 = vsub.s32 %v1681, %v1868
    %v1870 = vrot.slane %v1259, %v1869
    %v1871 = vsel %vm1686, %v1870, %v1866
    %v1872 = vlaneseq
    %v1873 = vshrl.u32 %v1872, 7
    %v1874 = vsub.s32 %v1688, %v1873
    %v1875 = vrot.slane %v1262, %v1874
    %v1876 = vsel %vm1693, %v1875, %v1871
    %v1877 = vlaneseq
    %v1878 = vshrl.u32 %v1877, 7
    %v1879 = vsub.s32 %v1695, %v1878
    %v1880 = vrot.slane %v1265, %v1879
    %v1881 = vsel %vm1700, %v1880, %v1876
    %v1882 = vlaneseq
    %v1883 = vshrl.u32 %v1882, 7
    %v1884 = vsub.s32 %v1702, %v1883
    %v1885 = vrot.slane %v1268, %v1884
    %v1886 = vsel %vm1707, %v1885, %v1881
    %v1887 = vlaneseq
    %v1888 = vshrl.u32 %v1887, 7
    %v1889 = vsub.s32 %v1709, %v1888
    %v1890 = vrot.slane %v1271, %v1889
    %v1891 = vsel %vm1714, %v1890, %v1886
    %v1892 = vlaneseq
    %v1893 = vshrl.u32 %v1892, 7
    %v1894 = vsub.s32 %v1716, %v1893
    %v1895 = vrot.slane %v1274, %v1894
    %v1896 = vsel %vm1721, %v1895, %v1891
    %v1897 = vlaneseq
    %v1898 = vshrl.u32 %v1897, 7
    %v1899 = vsub.s32 %v1723, %v1898
    %v1900 = vrot.slane %v1277, %v1899
    %v1901 = vsel %vm1728, %v1900, %v1896
    %v1902 = vlaneseq
    %v1903 = vshrl.u32 %v1902, 7
    %v1904 = vsub.s32 %v1730, %v1903
    %v1905 = vrot.slane %v1280, %v1904
    %v1906 = vsel %vm1735, %v1905, %v1901
    %v1907 = vlaneseq
    %v1908 = vshrl.u32 %v1907, 7
    %v1909 = vsub.s32 %v1737, %v1908
    %v1910 = vrot.slane %v1283, %v1909
    %v1911 = vsel %vm1742, %v1910, %v1906
    %v1912 = vlaneseq
    %v1913 = vshrl.u32 %v1912, 7
    %v1914 = vsub.s32 %v1744, %v1913
    %v1915 = vrot.slane %v1286, %v1914
    %v1916 = vsel %vm1749, %v1915, %v1911
    %v1917 = vlaneseq
    %v1918 = vshrl.u32 %v1917, 7
    %v1919 = vsub.s32 %v1751, %v1918
    %v1920 = vrot.slane %v1289, %v1919
    %v1921 = vsel %vm1756, %v1920, %v1916
    %v1922 = vlaneseq
    %v1923 = vshrl.u32 %v1922, 7
    %v1924 = vsub.s32 %v1758, %v1923
    %v1925 = vrot.slane %v1292, %v1924
    %v1926 = vsel %vm1763, %v1925, %v1921
    %v1927 = vlaneseq
    %v1928 = vshrl.u32 %v1927, 7
    %v1929 = vsub.s32 %v1765, %v1928
    %v1930 = vrot.slane %v1295, %v1929
    %v1931 = vsel %vm1770, %v1930, %v1926
    %v1932 = vlaneseq
    %v1933 = vshrl.u32 %v1932, 7
    %v1934 = vsub.s32 %v1772, %v1933
    %v1935 = vrot.slane %v1298, %v1934
    %v1936 = vsel %vm1777, %v1935, %v1931
    %v1937 = vlaneseq
    %v1938 = vshrl.u32 %v1937, 7
    %v1939 = vsub.s32 %v1540, %v1938
    %v1940 = vrot.slane %v1301, %v1939
    %v1941 = vlaneseq
    %v1942 = vshrl.u32 %v1941, 7
    %v1943 = vsub.s32 %v1674, %v1942
    %v1944 = vrot.slane %v1304, %v1943
    %v1945 = vsel %vm1679, %v1944, %v1940
    %v1946 = vlaneseq
    %v1947 = vshrl.u32 %v1946, 7
    %v1948 = vsub.s32 %v1681, %v1947
    %v1949 = vrot.slane %v1307, %v1948
    %v1950 = vsel %vm1686, %v1949, %v1945
    %v1951 = vlaneseq
    %v1952 = vshrl.u32 %v1951, 7
    %v1953 = vsub.s32 %v1688, %v1952
    %v1954 = vrot.slane %v1310, %v1953
    %v1955 = vsel %vm1693, %v1954, %v1950
    %v1956 = vlaneseq
    %v1957 = vshrl.u32 %v1956, 7
    %v1958 = vsub.s32 %v1695, %v1957
    %v1959 = vrot.slane %v1313, %v1958
    %v1960 = vsel %vm1700, %v1959, %v1955
    %v1961 = vlaneseq
    %v1962 = vshrl.u32 %v1961, 7
    %v1963 = vsub.s32 %v1702, %v1962
    %v1964 = vrot.slane %v1316, %v1963
    %v1965 = vsel %vm1707, %v1964, %v1960
    %v1966 = vlaneseq
    %v1967 = vshrl.u32 %v1966, 7
    %v1968 = vsub.s32 %v1709, %v1967
    %v1969 = vrot.slane %v1319, %v1968
    %v1970 = vsel %vm1714, %v1969, %v1965
    %v1971 = vlaneseq
    %v1972 = vshrl.u32 %v1971, 7
    %v1973 = vsub.s32 %v1716, %v1972
    %v1974 = vrot.slane %v1322, %v1973
    %v1975 = vsel %vm1721, %v1974, %v1970
    %v1976 = vlaneseq
    %v1977 = vshrl.u32 %v1976, 7
    %v1978 = vsub.s32 %v1723, %v1977
    %v1979 = vrot.slane %v1325, %v1978
    %v1980 = vsel %vm1728, %v1979, %v1975
    %v1981 = vlaneseq
    %v1982 = vshrl.u32 %v1981, 7
    %v1983 = vsub.s32 %v1730, %v1982
    %v1984 = vrot.slane %v1328, %v1983
    %v1985 = vsel %vm1735, %v1984, %v1980
    %v1986 = vlaneseq
    %v1987 = vshrl.u32 %v1986, 7
    %v1988 = vsub.s32 %v1737, %v1987
    %v1989 = vrot.slane %v1331, %v1988
    %v1990 = vsel %vm1742, %v1989, %v1985
    %v1991 = vlaneseq
    %v1992 = vshrl.u32 %v1991, 7
    %v1993 = vsub.s32 %v1744, %v1992
    %v1994 = vrot.slane %v1334, %v1993
    %v1995 = vsel %vm1749, %v1994, %v1990
    %v1996 = vlaneseq
    %v1997 = vshrl.u32 %v1996, 7
    %v1998 = vsub.s32 %v1751, %v1997
    %v1999 = vrot.slane %v1337, %v1998
    %v2000 = vsel %vm1756, %v1999, %v1995
    %v2001 = vlaneseq
    %v2002 = vshrl.u32 %v2001, 7
    %v2003 = vsub.s32 %v1758, %v2002
    %v2004 = vrot.slane %v1340, %v2003
    %v2005 = vsel %vm1763, %v2004, %v2000
    %v2006 = vlaneseq
    %v2007 = vshrl.u32 %v2006, 7
    %v2008 = vsub.s32 %v1765, %v2007
    %v2009 = vrot.slane %v1343, %v2008
    %v2010 = vsel %vm1770, %v2009, %v2005
    %v2011 = vlaneseq
    %v2012 = vshrl.u32 %v2011, 7
    %v2013 = vsub.s32 %v1772, %v2012
    %v2014 = vrot.slane %v1346, %v2013
    %v2015 = vsel %vm1777, %v2014, %v2010
    %v2016 = vlaneseq
    %v2017 = vshrl.u32 %v2016, 7
    %v2018 = vsub.s32 %v1540, %v2017
    %v2019 = vrot.slane %v1349, %v2018
    %v2020 = vlaneseq
    %v2021 = vshrl.u32 %v2020, 7
    %v2022 = vsub.s32 %v1674, %v2021
    %v2023 = vrot.slane %v1352, %v2022
    %v2024 = vsel %vm1679, %v2023, %v2019
    %v2025 = vlaneseq
    %v2026 = vshrl.u32 %v2025, 7
    %v2027 = vsub.s32 %v1681, %v2026
    %v2028 = vrot.slane %v1355, %v2027
    %v2029 = vsel %vm1686, %v2028, %v2024
    %v2030 = vlaneseq
    %v2031 = vshrl.u32 %v2030, 7
    %v2032 = vsub.s32 %v1688, %v2031
    %v2033 = vrot.slane %v1358, %v2032
    %v2034 = vsel %vm1693, %v2033, %v2029
    %v2035 = vlaneseq
    %v2036 = vshrl.u32 %v2035, 7
    %v2037 = vsub.s32 %v1695, %v2036
    %v2038 = vrot.slane %v1361, %v2037
    %v2039 = vsel %vm1700, %v2038, %v2034
    %v2040 = vlaneseq
    %v2041 = vshrl.u32 %v2040, 7
    %v2042 = vsub.s32 %v1702, %v2041
    %v2043 = vrot.slane %v1364, %v2042
    %v2044 = vsel %vm1707, %v2043, %v2039
    %v2045 = vlaneseq
    %v2046 = vshrl.u32 %v2045, 7
    %v2047 = vsub.s32 %v1709, %v2046
    %v2048 = vrot.slane %v1367, %v2047
    %v2049 = vsel %vm1714, %v2048, %v2044
    %v2050 = vlaneseq
    %v2051 = vshrl.u32 %v2050, 7
    %v2052 = vsub.s32 %v1716, %v2051
    %v2053 = vrot.slane %v1370, %v2052
    %v2054 = vsel %vm1721, %v2053, %v2049
    %v2055 = vlaneseq
    %v2056 = vshrl.u32 %v2055, 7
    %v2057 = vsub.s32 %v1723, %v2056
    %v2058 = vrot.slane %v1373, %v2057
    %v2059 = vsel %vm1728, %v2058, %v2054
    %v2060 = vlaneseq
    %v2061 = vshrl.u32 %v2060, 7
    %v2062 = vsub.s32 %v1730, %v2061
    %v2063 = vrot.slane %v1376, %v2062
    %v2064 = vsel %vm1735, %v2063, %v2059
    %v2065 = vlaneseq
    %v2066 = vshrl.u32 %v2065, 7
    %v2067 = vsub.s32 %v1737, %v2066
    %v2068 = vrot.slane %v1379, %v2067
    %v2069 = vsel %vm1742, %v2068, %v2064
    %v2070 = vlaneseq
    %v2071 = vshrl.u32 %v2070, 7
    %v2072 = vsub.s32 %v1744, %v2071
    %v2073 = vrot.slane %v1382, %v2072
    %v2074 = vsel %vm1749, %v2073, %v2069
    %v2075 = vlaneseq
    %v2076 = vshrl.u32 %v2075, 7
    %v2077 = vsub.s32 %v1751, %v2076
    %v2078 = vrot.slane %v1385, %v2077
    %v2079 = vsel %vm1756, %v2078, %v2074
    %v2080 = vlaneseq
    %v2081 = vshrl.u32 %v2080, 7
    %v2082 = vsub.s32 %v1758, %v2081
    %v2083 = vrot.slane %v1388, %v2082
    %v2084 = vsel %vm1763, %v2083, %v2079
    %v2085 = vlaneseq
    %v2086 = vshrl.u32 %v2085, 7
    %v2087 = vsub.s32 %v1765, %v2086
    %v2088 = vrot.slane %v1391, %v2087
    %v2089 = vsel %vm1770, %v2088, %v2084
    %v2090 = vlaneseq
    %v2091 = vshrl.u32 %v2090, 7
    %v2092 = vsub.s32 %v1772, %v2091
    %v2093 = vrot.slane %v1394, %v2092
    %v2094 = vsel %vm1777, %v2093, %v2089
    %v2095 = vlaneseq
    %v2096 = vshrl.u32 %v2095, 7
    %v2097 = vsub.s32 %v1540, %v2096
    %v2098 = vrot.slane %v1397, %v2097
    %v2099 = vlaneseq
    %v2100 = vshrl.u32 %v2099, 7
    %v2101 = vsub.s32 %v1674, %v2100
    %v2102 = vrot.slane %v1400, %v2101
    %v2103 = vsel %vm1679, %v2102, %v2098
    %v2104 = vlaneseq
    %v2105 = vshrl.u32 %v2104, 7
    %v2106 = vsub.s32 %v1681, %v2105
    %v2107 = vrot.slane %v1403, %v2106
    %v2108 = vsel %vm1686, %v2107, %v2103
    %v2109 = vlaneseq
    %v2110 = vshrl.u32 %v2109, 7
    %v2111 = vsub.s32 %v1688, %v2110
    %v2112 = vrot.slane %v1406, %v2111
    %v2113 = vsel %vm1693, %v2112, %v2108
    %v2114 = vlaneseq
    %v2115 = vshrl.u32 %v2114, 7
    %v2116 = vsub.s32 %v1695, %v2115
    %v2117 = vrot.slane %v1409, %v2116
    %v2118 = vsel %vm1700, %v2117, %v2113
    %v2119 = vlaneseq
    %v2120 = vshrl.u32 %v2119, 7
    %v2121 = vsub.s32 %v1702, %v2120
    %v2122 = vrot.slane %v1412, %v2121
    %v2123 = vsel %vm1707, %v2122, %v2118
    %v2124 = vlaneseq
    %v2125 = vshrl.u32 %v2124, 7
    %v2126 = vsub.s32 %v1709, %v2125
    %v2127 = vrot.slane %v1415, %v2126
    %v2128 = vsel %vm1714, %v2127, %v2123
    %v2129 = vlaneseq
    %v2130 = vshrl.u32 %v2129, 7
    %v2131 = vsub.s32 %v1716, %v2130
    %v2132 = vrot.slane %v1418, %v2131
    %v2133 = vsel %vm1721, %v2132, %v2128
    %v2134 = vlaneseq
    %v2135 = vshrl.u32 %v2134, 7
    %v2136 = vsub.s32 %v1723, %v2135
    %v2137 = vrot.slane %v1421, %v2136
    %v2138 = vsel %vm1728, %v2137, %v2133
    %v2139 = vlaneseq
    %v2140 = vshrl.u32 %v2139, 7
    %v2141 = vsub.s32 %v1730, %v2140
    %v2142 = vrot.slane %v1424, %v2141
    %v2143 = vsel %vm1735, %v2142, %v2138
    %v2144 = vlaneseq
    %v2145 = vshrl.u32 %v2144, 7
    %v2146 = vsub.s32 %v1737, %v2145
    %v2147 = vrot.slane %v1427, %v2146
    %v2148 = vsel %vm1742, %v2147, %v2143
    %v2149 = vlaneseq
    %v2150 = vshrl.u32 %v2149, 7
    %v2151 = vsub.s32 %v1744, %v2150
    %v2152 = vrot.slane %v1430, %v2151
    %v2153 = vsel %vm1749, %v2152, %v2148
    %v2154 = vlaneseq
    %v2155 = vshrl.u32 %v2154, 7
    %v2156 = vsub.s32 %v1751, %v2155
    %v2157 = vrot.slane %v1433, %v2156
    %v2158 = vsel %vm1756, %v2157, %v2153
    %v2159 = vlaneseq
    %v2160 = vshrl.u32 %v2159, 7
    %v2161 = vsub.s32 %v1758, %v2160
    %v2162 = vrot.slane %v1436, %v2161
    %v2163 = vsel %vm1763, %v2162, %v2158
    %v2164 = vlaneseq
    %v2165 = vshrl.u32 %v2164, 7
    %v2166 = vsub.s32 %v1765, %v2165
    %v2167 = vrot.slane %v1439, %v2166
    %v2168 = vsel %vm1770, %v2167, %v2163
    %v2169 = vlaneseq
    %v2170 = vshrl.u32 %v2169, 7
    %v2171 = vsub.s32 %v1772, %v2170
    %v2172 = vrot.slane %v1442, %v2171
    %v2173 = vsel %vm1777, %v2172, %v2168
    %v2174 = vlaneseq
    %v2175 = vshrl.u32 %v2174, 7
    %v2176 = vsub.s32 %v1540, %v2175
    %v2177 = vrot.slane %v1445, %v2176
    %v2178 = vlaneseq
    %v2179 = vshrl.u32 %v2178, 7
    %v2180 = vsub.s32 %v1674, %v2179
    %v2181 = vrot.slane %v1448, %v2180
    %v2182 = vsel %vm1679, %v2181, %v2177
    %v2183 = vlaneseq
    %v2184 = vshrl.u32 %v2183, 7
    %v2185 = vsub.s32 %v1681, %v2184
    %v2186 = vrot.slane %v1451, %v2185
    %v2187 = vsel %vm1686, %v2186, %v2182
    %v2188 = vlaneseq
    %v2189 = vshrl.u32 %v2188, 7
    %v2190 = vsub.s32 %v1688, %v2189
    %v2191 = vrot.slane %v1454, %v2190
    %v2192 = vsel %vm1693, %v2191, %v2187
    %v2193 = vlaneseq
    %v2194 = vshrl.u32 %v2193, 7
    %v2195 = vsub.s32 %v1695, %v2194
    %v2196 = vrot.slane %v1457, %v2195
    %v2197 = vsel %vm1700, %v2196, %v2192
    %v2198 = vlaneseq
    %v2199 = vshrl.u32 %v2198, 7
    %v2200 = vsub.s32 %v1702, %v2199
    %v2201 = vrot.slane %v1460, %v2200
    %v2202 = vsel %vm1707, %v2201, %v2197
    %v2203 = vlaneseq
    %v2204 = vshrl.u32 %v2203, 7
    %v2205 = vsub.s32 %v1709, %v2204
    %v2206 = vrot.slane %v1463, %v2205
    %v2207 = vsel %vm1714, %v2206, %v2202
    %v2208 = vlaneseq
    %v2209 = vshrl.u32 %v2208, 7
    %v2210 = vsub.s32 %v1716, %v2209
    %v2211 = vrot.slane %v1466, %v2210
    %v2212 = vsel %vm1721, %v2211, %v2207
    %v2213 = vlaneseq
    %v2214 = vshrl.u32 %v2213, 7
    %v2215 = vsub.s32 %v1723, %v2214
    %v2216 = vrot.slane %v1469, %v2215
    %v2217 = vsel %vm1728, %v2216, %v2212
    %v2218 = vlaneseq
    %v2219 = vshrl.u32 %v2218, 7
    %v2220 = vsub.s32 %v1730, %v2219
    %v2221 = vrot.slane %v1472, %v2220
    %v2222 = vsel %vm1735, %v2221, %v2217
    %v2223 = vlaneseq
    %v2224 = vshrl.u32 %v2223, 7
    %v2225 = vsub.s32 %v1737, %v2224
    %v2226 = vrot.slane %v1475, %v2225
    %v2227 = vsel %vm1742, %v2226, %v2222
    %v2228 = vlaneseq
    %v2229 = vshrl.u32 %v2228, 7
    %v2230 = vsub.s32 %v1744, %v2229
    %v2231 = vrot.slane %v1478, %v2230
    %v2232 = vsel %vm1749, %v2231, %v2227
    %v2233 = vlaneseq
    %v2234 = vshrl.u32 %v2233, 7
    %v2235 = vsub.s32 %v1751, %v2234
    %v2236 = vrot.slane %v1481, %v2235
    %v2237 = vsel %vm1756, %v2236, %v2232
    %v2238 = vlaneseq
    %v2239 = vshrl.u32 %v2238, 7
    %v2240 = vsub.s32 %v1758, %v2239
    %v2241 = vrot.slane %v1484, %v2240
    %v2242 = vsel %vm1763, %v2241, %v2237
    %v2243 = vlaneseq
    %v2244 = vshrl.u32 %v2243, 7
    %v2245 = vsub.s32 %v1765, %v2244
    %v2246 = vrot.slane %v1487, %v2245
    %v2247 = vsel %vm1770, %v2246, %v2242
    %v2248 = vlaneseq
    %v2249 = vshrl.u32 %v2248, 7
    %v2250 = vsub.s32 %v1772, %v2249
    %v2251 = vrot.slane %v1490, %v2250
    %v2252 = vsel %vm1777, %v2251, %v2247
    %v2253 = vlaneseq
    %v2254 = vshrl.u32 %v2253, 7
    %v2255 = vsub.s32 %v1540, %v2254
    %v2256 = vrot.slane %v1493, %v2255
    %v2257 = vlaneseq
    %v2258 = vshrl.u32 %v2257, 7
    %v2259 = vsub.s32 %v1674, %v2258
    %v2260 = vrot.slane %v1496, %v2259
    %v2261 = vsel %vm1679, %v2260, %v2256
    %v2262 = vlaneseq
    %v2263 = vshrl.u32 %v2262, 7
    %v2264 = vsub.s32 %v1681, %v2263
    %v2265 = vrot.slane %v1499, %v2264
    %v2266 = vsel %vm1686, %v2265, %v2261
    %v2267 = vlaneseq
    %v2268 = vshrl.u32 %v2267, 7
    %v2269 = vsub.s32 %v1688, %v2268
    %v2270 = vrot.slane %v1502, %v2269
    %v2271 = vsel %vm1693, %v2270, %v2266
    %v2272 = vlaneseq
    %v2273 = vshrl.u32 %v2272, 7
    %v2274 = vsub.s32 %v1695, %v2273
    %v2275 = vrot.slane %v1505, %v2274
    %v2276 = vsel %vm1700, %v2275, %v2271
    %v2277 = vlaneseq
    %v2278 = vshrl.u32 %v2277, 7
    %v2279 = vsub.s32 %v1702, %v2278
    %v2280 = vrot.slane %v1508, %v2279
    %v2281 = vsel %vm1707, %v2280, %v2276
    %v2282 = vlaneseq
    %v2283 = vshrl.u32 %v2282, 7
    %v2284 = vsub.s32 %v1709, %v2283
    %v2285 = vrot.slane %v1511, %v2284
    %v2286 = vsel %vm1714, %v2285, %v2281
    %v2287 = vlaneseq
    %v2288 = vshrl.u32 %v2287, 7
    %v2289 = vsub.s32 %v1716, %v2288
    %v2290 = vrot.slane %v1514, %v2289
    %v2291 = vsel %vm1721, %v2290, %v2286
    %v2292 = vlaneseq
    %v2293 = vshrl.u32 %v2292, 7
    %v2294 = vsub.s32 %v1723, %v2293
    %v2295 = vrot.slane %v1517, %v2294
    %v2296 = vsel %vm1728, %v2295, %v2291
    %v2297 = vlaneseq
    %v2298 = vshrl.u32 %v2297, 7
    %v2299 = vsub.s32 %v1730, %v2298
    %v2300 = vrot.slane %v1520, %v2299
    %v2301 = vsel %vm1735, %v2300, %v2296
    %v2302 = vlaneseq
    %v2303 = vshrl.u32 %v2302, 7
    %v2304 = vsub.s32 %v1737, %v2303
    %v2305 = vrot.slane %v1523, %v2304
    %v2306 = vsel %vm1742, %v2305, %v2301
    %v2307 = vlaneseq
    %v2308 = vshrl.u32 %v2307, 7
    %v2309 = vsub.s32 %v1744, %v2308
    %v2310 = vrot.slane %v1526, %v2309
    %v2311 = vsel %vm1749, %v2310, %v2306
    %v2312 = vlaneseq
    %v2313 = vshrl.u32 %v2312, 7
    %v2314 = vsub.s32 %v1751, %v2313
    %v2315 = vrot.slane %v1529, %v2314
    %v2316 = vsel %vm1756, %v2315, %v2311
    %v2317 = vlaneseq
    %v2318 = vshrl.u32 %v2317, 7
    %v2319 = vsub.s32 %v1758, %v2318
    %v2320 = vrot.slane %v1532, %v2319
    %v2321 = vsel %vm1763, %v2320, %v2316
    %v2322 = vlaneseq
    %v2323 = vshrl.u32 %v2322, 7
    %v2324 = vsub.s32 %v1765, %v2323
    %v2325 = vrot.slane %v1535, %v2324
    %v2326 = vsel %vm1770, %v2325, %v2321
    %v2327 = vlaneseq
    %v2328 = vshrl.u32 %v2327, 7
    %v2329 = vsub.s32 %v1772, %v2328
    %v2330 = vrot.slane %v1538, %v2329
    %v2331 = vsel %vm1777, %v2330, %v2326
    %vm2332 = vcmask 1041409
    %v2333 = vsel %vm2332, %v1857, %v1778
    %vm2334 = vcmask 1042434
    %v2335 = vsel %vm2334, %v1936, %v2333
    %vm2336 = vcmask 1043459
    %v2337 = vsel %vm2336, %v2015, %v2335
    %vm2338 = vcmask 1044484
    %v2339 = vsel %vm2338, %v2094, %v2337
    %vm2340 = vcmask 1045509
    %v2341 = vsel %vm2340, %v2173, %v2339
    %vm2342 = vcmask 1046534
    %v2343 = vsel %vm2342, %v2252, %v2341
    %vm2344 = vcmask 1047559
    %v2345 = vsel %vm2344, %v2331, %v2343
    %v2347 = vsel %vm1541, %v2345, -inf
    %2348 = vmax.xlane.f32.xlu0 %v2347
    %v2349 = vpop.xlane.xlu0 %2348
    %v2350 = vsub.f32 %v2347, %v2349
    %v2351 = vmul.f32 %v2350, 1.442695
    %v2352 = vpow.pop %v2351
    %2353 = vadd.xlane.f32.xlu0 %v2352
    %v2354 = vpop.xlane.xlu0 %2353
    %v2355 = vrcp.pop %v2354
    %v2356 = vmul.f32 %v2354, %v2355
    %v2357 = vsub.f32 2.0, %v2356
    %v2358 = vmul.f32 %v2355, %v2357
    %v2359 = vmul.f32 %v2352, %v2358
    %v2360 = vlaneseq
    %v2361 = vshrl.u32 %v2360, 7
    %v2362 = vsub.s32 0, %v2361
    %v2363 = vrot.slane %v2359, %v2362
    %2365 = vbcast.lane.b32.xlu0 %v2363, 256
    %v2366 = vpop.permute.xlu0 %2365
    %s2368 = sor.u32 256, 8
    %2369 = vbcast.lane.b32.xlu0 %v2363, %s2368
    %v2370 = vpop.permute.xlu0 %2369
    %s2372 = sor.u32 256, 16
    %2373 = vbcast.lane.b32.xlu0 %v2363, %s2372
    %v2374 = vpop.permute.xlu0 %2373
    %s2376 = sor.u32 256, 24
    %2377 = vbcast.lane.b32.xlu0 %v2363, %s2376
    %v2378 = vpop.permute.xlu0 %2377
    %s2380 = sor.u32 256, 32
    %2381 = vbcast.lane.b32.xlu0 %v2363, %s2380
    %v2382 = vpop.permute.xlu0 %2381
    %s2384 = sor.u32 256, 40
    %2385 = vbcast.lane.b32.xlu0 %v2363, %s2384
    %v2386 = vpop.permute.xlu0 %2385
    %s2388 = sor.u32 256, 48
    %2389 = vbcast.lane.b32.xlu0 %v2363, %s2388
    %v2390 = vpop.permute.xlu0 %2389
    %s2392 = sor.u32 256, 56
    %2393 = vbcast.lane.b32.xlu0 %v2363, %s2392
    %v2394 = vpop.permute.xlu0 %2393
    %s2396 = sor.u32 256, 64
    %2397 = vbcast.lane.b32.xlu0 %v2363, %s2396
    %v2398 = vpop.permute.xlu0 %2397
    %s2400 = sor.u32 256, 72
    %2401 = vbcast.lane.b32.xlu0 %v2363, %s2400
    %v2402 = vpop.permute.xlu0 %2401
    %s2404 = sor.u32 256, 80
    %2405 = vbcast.lane.b32.xlu0 %v2363, %s2404
    %v2406 = vpop.permute.xlu0 %2405
    %s2408 = sor.u32 256, 88
    %2409 = vbcast.lane.b32.xlu0 %v2363, %s2408
    %v2410 = vpop.permute.xlu0 %2409
    %s2412 = sor.u32 256, 96
    %2413 = vbcast.lane.b32.xlu0 %v2363, %s2412
    %v2414 = vpop.permute.xlu0 %2413
    %s2416 = sor.u32 256, 104
    %2417 = vbcast.lane.b32.xlu0 %v2363, %s2416
    %v2418 = vpop.permute.xlu0 %2417
    %s2420 = sor.u32 256, 112
    %2421 = vbcast.lane.b32.xlu0 %v2363, %s2420
    %v2422 = vpop.permute.xlu0 %2421
    %s2424 = sor.u32 256, 120
    %2425 = vbcast.lane.b32.xlu0 %v2363, %s2424
    %v2426 = vpop.permute.xlu0 %2425
    %v2427 = vlaneseq
    %v2428 = vshrl.u32 %v2427, 7
    %v2429 = vsub.s32 1, %v2428
    %v2430 = vrot.slane %v2359, %v2429
    %2432 = vbcast.lane.b32.xlu0 %v2430, 256
    %v2433 = vpop.permute.xlu0 %2432
    %s2435 = sor.u32 256, 8
    %2436 = vbcast.lane.b32.xlu0 %v2430, %s2435
    %v2437 = vpop.permute.xlu0 %2436
    %s2439 = sor.u32 256, 16
    %2440 = vbcast.lane.b32.xlu0 %v2430, %s2439
    %v2441 = vpop.permute.xlu0 %2440
    %s2443 = sor.u32 256, 24
    %2444 = vbcast.lane.b32.xlu0 %v2430, %s2443
    %v2445 = vpop.permute.xlu0 %2444
    %s2447 = sor.u32 256, 32
    %2448 = vbcast.lane.b32.xlu0 %v2430, %s2447
    %v2449 = vpop.permute.xlu0 %2448
    %s2451 = sor.u32 256, 40
    %2452 = vbcast.lane.b32.xlu0 %v2430, %s2451
    %v2453 = vpop.permute.xlu0 %2452
    %s2455 = sor.u32 256, 48
    %2456 = vbcast.lane.b32.xlu0 %v2430, %s2455
    %v2457 = vpop.permute.xlu0 %2456
    %s2459 = sor.u32 256, 56
    %2460 = vbcast.lane.b32.xlu0 %v2430, %s2459
    %v2461 = vpop.permute.xlu0 %2460
    %s2463 = sor.u32 256, 64
    %2464 = vbcast.lane.b32.xlu0 %v2430, %s2463
    %v2465 = vpop.permute.xlu0 %2464
    %s2467 = sor.u32 256, 72
    %2468 = vbcast.lane.b32.xlu0 %v2430, %s2467
    %v2469 = vpop.permute.xlu0 %2468
    %s2471 = sor.u32 256, 80
    %2472 = vbcast.lane.b32.xlu0 %v2430, %s2471
    %v2473 = vpop.permute.xlu0 %2472
    %s2475 = sor.u32 256, 88
    %2476 = vbcast.lane.b32.xlu0 %v2430, %s2475
    %v2477 = vpop.permute.xlu0 %2476
    %s2479 = sor.u32 256, 96
    %2480 = vbcast.lane.b32.xlu0 %v2430, %s2479
    %v2481 = vpop.permute.xlu0 %2480
    %s2483 = sor.u32 256, 104
    %2484 = vbcast.lane.b32.xlu0 %v2430, %s2483
    %v2485 = vpop.permute.xlu0 %2484
    %s2487 = sor.u32 256, 112
    %2488 = vbcast.lane.b32.xlu0 %v2430, %s2487
    %v2489 = vpop.permute.xlu0 %2488
    %s2491 = sor.u32 256, 120
    %2492 = vbcast.lane.b32.xlu0 %v2430, %s2491
    %v2493 = vpop.permute.xlu0 %2492
    %v2494 = vlaneseq
    %v2495 = vshrl.u32 %v2494, 7
    %v2496 = vsub.s32 2, %v2495
    %v2497 = vrot.slane %v2359, %v2496
    %2499 = vbcast.lane.b32.xlu0 %v2497, 256
    %v2500 = vpop.permute.xlu0 %2499
    %s2502 = sor.u32 256, 8
    %2503 = vbcast.lane.b32.xlu0 %v2497, %s2502
    %v2504 = vpop.permute.xlu0 %2503
    %s2506 = sor.u32 256, 16
    %2507 = vbcast.lane.b32.xlu0 %v2497, %s2506
    %v2508 = vpop.permute.xlu0 %2507
    %s2510 = sor.u32 256, 24
    %2511 = vbcast.lane.b32.xlu0 %v2497, %s2510
    %v2512 = vpop.permute.xlu0 %2511
    %s2514 = sor.u32 256, 32
    %2515 = vbcast.lane.b32.xlu0 %v2497, %s2514
    %v2516 = vpop.permute.xlu0 %2515
    %s2518 = sor.u32 256, 40
    %2519 = vbcast.lane.b32.xlu0 %v2497, %s2518
    %v2520 = vpop.permute.xlu0 %2519
    %s2522 = sor.u32 256, 48
    %2523 = vbcast.lane.b32.xlu0 %v2497, %s2522
    %v2524 = vpop.permute.xlu0 %2523
    %s2526 = sor.u32 256, 56
    %2527 = vbcast.lane.b32.xlu0 %v2497, %s2526
    %v2528 = vpop.permute.xlu0 %2527
    %s2530 = sor.u32 256, 64
    %2531 = vbcast.lane.b32.xlu0 %v2497, %s2530
    %v2532 = vpop.permute.xlu0 %2531
    %s2534 = sor.u32 256, 72
    %2535 = vbcast.lane.b32.xlu0 %v2497, %s2534
    %v2536 = vpop.permute.xlu0 %2535
    %s2538 = sor.u32 256, 80
    %2539 = vbcast.lane.b32.xlu0 %v2497, %s2538
    %v2540 = vpop.permute.xlu0 %2539
    %s2542 = sor.u32 256, 88
    %2543 = vbcast.lane.b32.xlu0 %v2497, %s2542
    %v2544 = vpop.permute.xlu0 %2543
    %s2546 = sor.u32 256, 96
    %2547 = vbcast.lane.b32.xlu0 %v2497, %s2546
    %v2548 = vpop.permute.xlu0 %2547
    %s2550 = sor.u32 256, 104
    %2551 = vbcast.lane.b32.xlu0 %v2497, %s2550
    %v2552 = vpop.permute.xlu0 %2551
    %s2554 = sor.u32 256, 112
    %2555 = vbcast.lane.b32.xlu0 %v2497, %s2554
    %v2556 = vpop.permute.xlu0 %2555
    %s2558 = sor.u32 256, 120
    %2559 = vbcast.lane.b32.xlu0 %v2497, %s2558
    %v2560 = vpop.permute.xlu0 %2559
    %v2561 = vlaneseq
    %v2562 = vshrl.u32 %v2561, 7
    %v2563 = vsub.s32 3, %v2562
    %v2564 = vrot.slane %v2359, %v2563
    %2566 = vbcast.lane.b32.xlu0 %v2564, 256
    %v2567 = vpop.permute.xlu0 %2566
    %s2569 = sor.u32 256, 8
    %2570 = vbcast.lane.b32.xlu0 %v2564, %s2569
    %v2571 = vpop.permute.xlu0 %2570
    %s2573 = sor.u32 256, 16
    %2574 = vbcast.lane.b32.xlu0 %v2564, %s2573
    %v2575 = vpop.permute.xlu0 %2574
    %s2577 = sor.u32 256, 24
    %2578 = vbcast.lane.b32.xlu0 %v2564, %s2577
    %v2579 = vpop.permute.xlu0 %2578
    %s2581 = sor.u32 256, 32
    %2582 = vbcast.lane.b32.xlu0 %v2564, %s2581
    %v2583 = vpop.permute.xlu0 %2582
    %s2585 = sor.u32 256, 40
    %2586 = vbcast.lane.b32.xlu0 %v2564, %s2585
    %v2587 = vpop.permute.xlu0 %2586
    %s2589 = sor.u32 256, 48
    %2590 = vbcast.lane.b32.xlu0 %v2564, %s2589
    %v2591 = vpop.permute.xlu0 %2590
    %s2593 = sor.u32 256, 56
    %2594 = vbcast.lane.b32.xlu0 %v2564, %s2593
    %v2595 = vpop.permute.xlu0 %2594
    %s2597 = sor.u32 256, 64
    %2598 = vbcast.lane.b32.xlu0 %v2564, %s2597
    %v2599 = vpop.permute.xlu0 %2598
    %s2601 = sor.u32 256, 72
    %2602 = vbcast.lane.b32.xlu0 %v2564, %s2601
    %v2603 = vpop.permute.xlu0 %2602
    %s2605 = sor.u32 256, 80
    %2606 = vbcast.lane.b32.xlu0 %v2564, %s2605
    %v2607 = vpop.permute.xlu0 %2606
    %s2609 = sor.u32 256, 88
    %2610 = vbcast.lane.b32.xlu0 %v2564, %s2609
    %v2611 = vpop.permute.xlu0 %2610
    %s2613 = sor.u32 256, 96
    %2614 = vbcast.lane.b32.xlu0 %v2564, %s2613
    %v2615 = vpop.permute.xlu0 %2614
    %s2617 = sor.u32 256, 104
    %2618 = vbcast.lane.b32.xlu0 %v2564, %s2617
    %v2619 = vpop.permute.xlu0 %2618
    %s2621 = sor.u32 256, 112
    %2622 = vbcast.lane.b32.xlu0 %v2564, %s2621
    %v2623 = vpop.permute.xlu0 %2622
    %s2625 = sor.u32 256, 120
    %2626 = vbcast.lane.b32.xlu0 %v2564, %s2625
    %v2627 = vpop.permute.xlu0 %2626
    %v2628 = vlaneseq
    %v2629 = vshrl.u32 %v2628, 7
    %v2630 = vsub.s32 4, %v2629
    %v2631 = vrot.slane %v2359, %v2630
    %2633 = vbcast.lane.b32.xlu0 %v2631, 256
    %v2634 = vpop.permute.xlu0 %2633
    %s2636 = sor.u32 256, 8
    %2637 = vbcast.lane.b32.xlu0 %v2631, %s2636
    %v2638 = vpop.permute.xlu0 %2637
    %s2640 = sor.u32 256, 16
    %2641 = vbcast.lane.b32.xlu0 %v2631, %s2640
    %v2642 = vpop.permute.xlu0 %2641
    %s2644 = sor.u32 256, 24
    %2645 = vbcast.lane.b32.xlu0 %v2631, %s2644
    %v2646 = vpop.permute.xlu0 %2645
    %s2648 = sor.u32 256, 32
    %2649 = vbcast.lane.b32.xlu0 %v2631, %s2648
    %v2650 = vpop.permute.xlu0 %2649
    %s2652 = sor.u32 256, 40
    %2653 = vbcast.lane.b32.xlu0 %v2631, %s2652
    %v2654 = vpop.permute.xlu0 %2653
    %s2656 = sor.u32 256, 48
    %2657 = vbcast.lane.b32.xlu0 %v2631, %s2656
    %v2658 = vpop.permute.xlu0 %2657
    %s2660 = sor.u32 256, 56
    %2661 = vbcast.lane.b32.xlu0 %v2631, %s2660
    %v2662 = vpop.permute.xlu0 %2661
    %s2664 = sor.u32 256, 64
    %2665 = vbcast.lane.b32.xlu0 %v2631, %s2664
    %v2666 = vpop.permute.xlu0 %2665
    %s2668 = sor.u32 256, 72
    %2669 = vbcast.lane.b32.xlu0 %v2631, %s2668
    %v2670 = vpop.permute.xlu0 %2669
    %s2672 = sor.u32 256, 80
    %2673 = vbcast.lane.b32.xlu0 %v2631, %s2672
    %v2674 = vpop.permute.xlu0 %2673
    %s2676 = sor.u32 256, 88
    %2677 = vbcast.lane.b32.xlu0 %v2631, %s2676
    %v2678 = vpop.permute.xlu0 %2677
    %s2680 = sor.u32 256, 96
    %2681 = vbcast.lane.b32.xlu0 %v2631, %s2680
    %v2682 = vpop.permute.xlu0 %2681
    %s2684 = sor.u32 256, 104
    %2685 = vbcast.lane.b32.xlu0 %v2631, %s2684
    %v2686 = vpop.permute.xlu0 %2685
    %s2688 = sor.u32 256, 112
    %2689 = vbcast.lane.b32.xlu0 %v2631, %s2688
    %v2690 = vpop.permute.xlu0 %2689
    %s2692 = sor.u32 256, 120
    %2693 = vbcast.lane.b32.xlu0 %v2631, %s2692
    %v2694 = vpop.permute.xlu0 %2693
    %v2695 = vlaneseq
    %v2696 = vshrl.u32 %v2695, 7
    %v2697 = vsub.s32 5, %v2696
    %v2698 = vrot.slane %v2359, %v2697
    %2700 = vbcast.lane.b32.xlu0 %v2698, 256
    %v2701 = vpop.permute.xlu0 %2700
    %s2703 = sor.u32 256, 8
    %2704 = vbcast.lane.b32.xlu0 %v2698, %s2703
    %v2705 = vpop.permute.xlu0 %2704
    %s2707 = sor.u32 256, 16
    %2708 = vbcast.lane.b32.xlu0 %v2698, %s2707
    %v2709 = vpop.permute.xlu0 %2708
    %s2711 = sor.u32 256, 24
    %2712 = vbcast.lane.b32.xlu0 %v2698, %s2711
    %v2713 = vpop.permute.xlu0 %2712
    %s2715 = sor.u32 256, 32
    %2716 = vbcast.lane.b32.xlu0 %v2698, %s2715
    %v2717 = vpop.permute.xlu0 %2716
    %s2719 = sor.u32 256, 40
    %2720 = vbcast.lane.b32.xlu0 %v2698, %s2719
    %v2721 = vpop.permute.xlu0 %2720
    %s2723 = sor.u32 256, 48
    %2724 = vbcast.lane.b32.xlu0 %v2698, %s2723
    %v2725 = vpop.permute.xlu0 %2724
    %s2727 = sor.u32 256, 56
    %2728 = vbcast.lane.b32.xlu0 %v2698, %s2727
    %v2729 = vpop.permute.xlu0 %2728
    %s2731 = sor.u32 256, 64
    %2732 = vbcast.lane.b32.xlu0 %v2698, %s2731
    %v2733 = vpop.permute.xlu0 %2732
    %s2735 = sor.u32 256, 72
    %2736 = vbcast.lane.b32.xlu0 %v2698, %s2735
    %v2737 = vpop.permute.xlu0 %2736
    %s2739 = sor.u32 256, 80
    %2740 = vbcast.lane.b32.xlu0 %v2698, %s2739
    %v2741 = vpop.permute.xlu0 %2740
    %s2743 = sor.u32 256, 88
    %2744 = vbcast.lane.b32.xlu0 %v2698, %s2743
    %v2745 = vpop.permute.xlu0 %2744
    %s2747 = sor.u32 256, 96
    %2748 = vbcast.lane.b32.xlu0 %v2698, %s2747
    %v2749 = vpop.permute.xlu0 %2748
    %s2751 = sor.u32 256, 104
    %2752 = vbcast.lane.b32.xlu0 %v2698, %s2751
    %v2753 = vpop.permute.xlu0 %2752
    %s2755 = sor.u32 256, 112
    %2756 = vbcast.lane.b32.xlu0 %v2698, %s2755
    %v2757 = vpop.permute.xlu0 %2756
    %s2759 = sor.u32 256, 120
    %2760 = vbcast.lane.b32.xlu0 %v2698, %s2759
    %v2761 = vpop.permute.xlu0 %2760
    %v2762 = vlaneseq
    %v2763 = vshrl.u32 %v2762, 7
    %v2764 = vsub.s32 6, %v2763
    %v2765 = vrot.slane %v2359, %v2764
    %2767 = vbcast.lane.b32.xlu0 %v2765, 256
    %v2768 = vpop.permute.xlu0 %2767
    %s2770 = sor.u32 256, 8
    %2771 = vbcast.lane.b32.xlu0 %v2765, %s2770
    %v2772 = vpop.permute.xlu0 %2771
    %s2774 = sor.u32 256, 16
    %2775 = vbcast.lane.b32.xlu0 %v2765, %s2774
    %v2776 = vpop.permute.xlu0 %2775
    %s2778 = sor.u32 256, 24
    %2779 = vbcast.lane.b32.xlu0 %v2765, %s2778
    %v2780 = vpop.permute.xlu0 %2779
    %s2782 = sor.u32 256, 32
    %2783 = vbcast.lane.b32.xlu0 %v2765, %s2782
    %v2784 = vpop.permute.xlu0 %2783
    %s2786 = sor.u32 256, 40
    %2787 = vbcast.lane.b32.xlu0 %v2765, %s2786
    %v2788 = vpop.permute.xlu0 %2787
    %s2790 = sor.u32 256, 48
    %2791 = vbcast.lane.b32.xlu0 %v2765, %s2790
    %v2792 = vpop.permute.xlu0 %2791
    %s2794 = sor.u32 256, 56
    %2795 = vbcast.lane.b32.xlu0 %v2765, %s2794
    %v2796 = vpop.permute.xlu0 %2795
    %s2798 = sor.u32 256, 64
    %2799 = vbcast.lane.b32.xlu0 %v2765, %s2798
    %v2800 = vpop.permute.xlu0 %2799
    %s2802 = sor.u32 256, 72
    %2803 = vbcast.lane.b32.xlu0 %v2765, %s2802
    %v2804 = vpop.permute.xlu0 %2803
    %s2806 = sor.u32 256, 80
    %2807 = vbcast.lane.b32.xlu0 %v2765, %s2806
    %v2808 = vpop.permute.xlu0 %2807
    %s2810 = sor.u32 256, 88
    %2811 = vbcast.lane.b32.xlu0 %v2765, %s2810
    %v2812 = vpop.permute.xlu0 %2811
    %s2814 = sor.u32 256, 96
    %2815 = vbcast.lane.b32.xlu0 %v2765, %s2814
    %v2816 = vpop.permute.xlu0 %2815
    %s2818 = sor.u32 256, 104
    %2819 = vbcast.lane.b32.xlu0 %v2765, %s2818
    %v2820 = vpop.permute.xlu0 %2819
    %s2822 = sor.u32 256, 112
    %2823 = vbcast.lane.b32.xlu0 %v2765, %s2822
    %v2824 = vpop.permute.xlu0 %2823
    %s2826 = sor.u32 256, 120
    %2827 = vbcast.lane.b32.xlu0 %v2765, %s2826
    %v2828 = vpop.permute.xlu0 %2827
    %v2829 = vlaneseq
    %v2830 = vshrl.u32 %v2829, 7
    %v2831 = vsub.s32 7, %v2830
    %v2832 = vrot.slane %v2359, %v2831
    %2834 = vbcast.lane.b32.xlu0 %v2832, 256
    %v2835 = vpop.permute.xlu0 %2834
    %s2837 = sor.u32 256, 8
    %2838 = vbcast.lane.b32.xlu0 %v2832, %s2837
    %v2839 = vpop.permute.xlu0 %2838
    %s2841 = sor.u32 256, 16
    %2842 = vbcast.lane.b32.xlu0 %v2832, %s2841
    %v2843 = vpop.permute.xlu0 %2842
    %s2845 = sor.u32 256, 24
    %2846 = vbcast.lane.b32.xlu0 %v2832, %s2845
    %v2847 = vpop.permute.xlu0 %2846
    %s2849 = sor.u32 256, 32
    %2850 = vbcast.lane.b32.xlu0 %v2832, %s2849
    %v2851 = vpop.permute.xlu0 %2850
    %s2853 = sor.u32 256, 40
    %2854 = vbcast.lane.b32.xlu0 %v2832, %s2853
    %v2855 = vpop.permute.xlu0 %2854
    %s2857 = sor.u32 256, 48
    %2858 = vbcast.lane.b32.xlu0 %v2832, %s2857
    %v2859 = vpop.permute.xlu0 %2858
    %s2861 = sor.u32 256, 56
    %2862 = vbcast.lane.b32.xlu0 %v2832, %s2861
    %v2863 = vpop.permute.xlu0 %2862
    %s2865 = sor.u32 256, 64
    %2866 = vbcast.lane.b32.xlu0 %v2832, %s2865
    %v2867 = vpop.permute.xlu0 %2866
    %s2869 = sor.u32 256, 72
    %2870 = vbcast.lane.b32.xlu0 %v2832, %s2869
    %v2871 = vpop.permute.xlu0 %2870
    %s2873 = sor.u32 256, 80
    %2874 = vbcast.lane.b32.xlu0 %v2832, %s2873
    %v2875 = vpop.permute.xlu0 %2874
    %s2877 = sor.u32 256, 88
    %2878 = vbcast.lane.b32.xlu0 %v2832, %s2877
    %v2879 = vpop.permute.xlu0 %2878
    %s2881 = sor.u32 256, 96
    %2882 = vbcast.lane.b32.xlu0 %v2832, %s2881
    %v2883 = vpop.permute.xlu0 %2882
    %s2885 = sor.u32 256, 104
    %2886 = vbcast.lane.b32.xlu0 %v2832, %s2885
    %v2887 = vpop.permute.xlu0 %2886
    %s2889 = sor.u32 256, 112
    %2890 = vbcast.lane.b32.xlu0 %v2832, %s2889
    %v2891 = vpop.permute.xlu0 %2890
    %s2893 = sor.u32 256, 120
    %2894 = vbcast.lane.b32.xlu0 %v2832, %s2893
    %v2895 = vpop.permute.xlu0 %2894
    %v2896 = vmul.f32 %v35, %v2366
    %v2897 = vmul.f32 %v36, %v2370
    %v2898 = vmul.f32 %v37, %v2374
    %v2899 = vmul.f32 %v38, %v2378
    %v2900 = vmul.f32 %v39, %v2382
    %v2901 = vmul.f32 %v40, %v2386
    %v2902 = vmul.f32 %v41, %v2390
    %v2903 = vmul.f32 %v42, %v2394
    %v2904 = vmul.f32 %v43, %v2398
    %v2905 = vmul.f32 %v44, %v2402
    %v2906 = vmul.f32 %v45, %v2406
    %v2907 = vmul.f32 %v46, %v2410
    %v2908 = vmul.f32 %v47, %v2414
    %v2909 = vmul.f32 %v48, %v2418
    %v2910 = vmul.f32 %v49, %v2422
    %v2911 = vmul.f32 %v50, %v2426
    %v2912 = vmul.f32 %v51, %v2433
    %v2913 = vmul.f32 %v52, %v2437
    %v2914 = vmul.f32 %v53, %v2441
    %v2915 = vmul.f32 %v54, %v2445
    %v2916 = vmul.f32 %v55, %v2449
    %v2917 = vmul.f32 %v56, %v2453
    %v2918 = vmul.f32 %v57, %v2457
    %v2919 = vmul.f32 %v58, %v2461
    %v2920 = vmul.f32 %v59, %v2465
    %v2921 = vmul.f32 %v60, %v2469
    %v2922 = vmul.f32 %v61, %v2473
    %v2923 = vmul.f32 %v62, %v2477
    %v2924 = vmul.f32 %v63, %v2481
    %v2925 = vmul.f32 %v64, %v2485
    %v2926 = vmul.f32 %v65, %v2489
    %v2927 = vmul.f32 %v66, %v2493
    %v2928 = vmul.f32 %v67, %v2500
    %v2929 = vmul.f32 %v68, %v2504
    %v2930 = vmul.f32 %v69, %v2508
    %v2931 = vmul.f32 %v70, %v2512
    %v2932 = vmul.f32 %v71, %v2516
    %v2933 = vmul.f32 %v72, %v2520
    %v2934 = vmul.f32 %v73, %v2524
    %v2935 = vmul.f32 %v74, %v2528
    %v2936 = vmul.f32 %v75, %v2532
    %v2937 = vmul.f32 %v76, %v2536
    %v2938 = vmul.f32 %v77, %v2540
    %v2939 = vmul.f32 %v78, %v2544
    %v2940 = vmul.f32 %v79, %v2548
    %v2941 = vmul.f32 %v80, %v2552
    %v2942 = vmul.f32 %v81, %v2556
    %v2943 = vmul.f32 %v82, %v2560
    %v2944 = vmul.f32 %v83, %v2567
    %v2945 = vmul.f32 %v84, %v2571
    %v2946 = vmul.f32 %v85, %v2575
    %v2947 = vmul.f32 %v86, %v2579
    %v2948 = vmul.f32 %v87, %v2583
    %v2949 = vmul.f32 %v88, %v2587
    %v2950 = vmul.f32 %v89, %v2591
    %v2951 = vmul.f32 %v90, %v2595
    %v2952 = vmul.f32 %v91, %v2599
    %v2953 = vmul.f32 %v92, %v2603
    %v2954 = vmul.f32 %v93, %v2607
    %v2955 = vmul.f32 %v94, %v2611
    %v2956 = vmul.f32 %v95, %v2615
    %v2957 = vmul.f32 %v96, %v2619
    %v2958 = vmul.f32 %v97, %v2623
    %v2959 = vmul.f32 %v98, %v2627
    %v2960 = vmul.f32 %v99, %v2634
    %v2961 = vmul.f32 %v100, %v2638
    %v2962 = vmul.f32 %v101, %v2642
    %v2963 = vmul.f32 %v102, %v2646
    %v2964 = vmul.f32 %v103, %v2650
    %v2965 = vmul.f32 %v104, %v2654
    %v2966 = vmul.f32 %v105, %v2658
    %v2967 = vmul.f32 %v106, %v2662
    %v2968 = vmul.f32 %v107, %v2666
    %v2969 = vmul.f32 %v108, %v2670
    %v2970 = vmul.f32 %v109, %v2674
    %v2971 = vmul.f32 %v110, %v2678
    %v2972 = vmul.f32 %v111, %v2682
    %v2973 = vmul.f32 %v112, %v2686
    %v2974 = vmul.f32 %v113, %v2690
    %v2975 = vmul.f32 %v114, %v2694
    %v2976 = vmul.f32 %v115, %v2701
    %v2977 = vmul.f32 %v116, %v2705
    %v2978 = vmul.f32 %v117, %v2709
    %v2979 = vmul.f32 %v118, %v2713
    %v2980 = vmul.f32 %v119, %v2717
    %v2981 = vmul.f32 %v120, %v2721
    %v2982 = vmul.f32 %v121, %v2725
    %v2983 = vmul.f32 %v122, %v2729
    %v2984 = vmul.f32 %v123, %v2733
    %v2985 = vmul.f32 %v124, %v2737
    %v2986 = vmul.f32 %v125, %v2741
    %v2987 = vmul.f32 %v126, %v2745
    %v2988 = vmul.f32 %v127, %v2749
    %v2989 = vmul.f32 %v128, %v2753
    %v2990 = vmul.f32 %v129, %v2757
    %v2991 = vmul.f32 %v130, %v2761
    %v2992 = vmul.f32 %v131, %v2768
    %v2993 = vmul.f32 %v132, %v2772
    %v2994 = vmul.f32 %v133, %v2776
    %v2995 = vmul.f32 %v134, %v2780
    %v2996 = vmul.f32 %v135, %v2784
    %v2997 = vmul.f32 %v136, %v2788
    %v2998 = vmul.f32 %v137, %v2792
    %v2999 = vmul.f32 %v138, %v2796
    %v3000 = vmul.f32 %v139, %v2800
    %v3001 = vmul.f32 %v140, %v2804
    %v3002 = vmul.f32 %v141, %v2808
    %v3003 = vmul.f32 %v142, %v2812
    %v3004 = vmul.f32 %v143, %v2816
    %v3005 = vmul.f32 %v144, %v2820
    %v3006 = vmul.f32 %v145, %v2824
    %v3007 = vmul.f32 %v146, %v2828
    %v3008 = vmul.f32 %v147, %v2835
    %v3009 = vmul.f32 %v148, %v2839
    %v3010 = vmul.f32 %v149, %v2843
    %v3011 = vmul.f32 %v150, %v2847
    %v3012 = vmul.f32 %v151, %v2851
    %v3013 = vmul.f32 %v152, %v2855
    %v3014 = vmul.f32 %v153, %v2859
    %v3015 = vmul.f32 %v154, %v2863
    %v3016 = vmul.f32 %v155, %v2867
    %v3017 = vmul.f32 %v156, %v2871
    %v3018 = vmul.f32 %v157, %v2875
    %v3019 = vmul.f32 %v158, %v2879
    %v3020 = vmul.f32 %v159, %v2883
    %v3021 = vmul.f32 %v160, %v2887
    %v3022 = vmul.f32 %v161, %v2891
    %v3023 = vmul.f32 %v162, %v2895
    %v3024 = vadd.f32 %v2896, %v2897
    %v3025 = vadd.f32 %v3024, %v2898
    %v3026 = vadd.f32 %v3025, %v2899
    %v3027 = vadd.f32 %v3026, %v2900
    %v3028 = vadd.f32 %v3027, %v2901
    %v3029 = vadd.f32 %v3028, %v2902
    %v3030 = vadd.f32 %v3029, %v2903
    %v3031 = vadd.f32 %v3030, %v2904
    %v3032 = vadd.f32 %v3031, %v2905
    %v3033 = vadd.f32 %v3032, %v2906
    %v3034 = vadd.f32 %v3033, %v2907
    %v3035 = vadd.f32 %v3034, %v2908
    %v3036 = vadd.f32 %v3035, %v2909
    %v3037 = vadd.f32 %v3036, %v2910
    %v3038 = vadd.f32 %v3037, %v2911
    %v3039 = vrot.slane %v3038, 4
    %v3040 = vadd.f32 %v3038, %v3039
    %v3041 = vrot.slane %v3040, 2
    %v3042 = vadd.f32 %v3040, %v3041
    %v3043 = vrot.slane %v3042, 1
    %v3044 = vadd.f32 %v3042, %v3043
    %v3045 = vadd.f32 %v2912, %v2913
    %v3046 = vadd.f32 %v3045, %v2914
    %v3047 = vadd.f32 %v3046, %v2915
    %v3048 = vadd.f32 %v3047, %v2916
    %v3049 = vadd.f32 %v3048, %v2917
    %v3050 = vadd.f32 %v3049, %v2918
    %v3051 = vadd.f32 %v3050, %v2919
    %v3052 = vadd.f32 %v3051, %v2920
    %v3053 = vadd.f32 %v3052, %v2921
    %v3054 = vadd.f32 %v3053, %v2922
    %v3055 = vadd.f32 %v3054, %v2923
    %v3056 = vadd.f32 %v3055, %v2924
    %v3057 = vadd.f32 %v3056, %v2925
    %v3058 = vadd.f32 %v3057, %v2926
    %v3059 = vadd.f32 %v3058, %v2927
    %v3060 = vrot.slane %v3059, 4
    %v3061 = vadd.f32 %v3059, %v3060
    %v3062 = vrot.slane %v3061, 2
    %v3063 = vadd.f32 %v3061, %v3062
    %v3064 = vrot.slane %v3063, 1
    %v3065 = vadd.f32 %v3063, %v3064
    %v3066 = vadd.f32 %v2928, %v2929
    %v3067 = vadd.f32 %v3066, %v2930
    %v3068 = vadd.f32 %v3067, %v2931
    %v3069 = vadd.f32 %v3068, %v2932
    %v3070 = vadd.f32 %v3069, %v2933
    %v3071 = vadd.f32 %v3070, %v2934
    %v3072 = vadd.f32 %v3071, %v2935
    %v3073 = vadd.f32 %v3072, %v2936
    %v3074 = vadd.f32 %v3073, %v2937
    %v3075 = vadd.f32 %v3074, %v2938
    %v3076 = vadd.f32 %v3075, %v2939
    %v3077 = vadd.f32 %v3076, %v2940
    %v3078 = vadd.f32 %v3077, %v2941
    %v3079 = vadd.f32 %v3078, %v2942
    %v3080 = vadd.f32 %v3079, %v2943
    %v3081 = vrot.slane %v3080, 4
    %v3082 = vadd.f32 %v3080, %v3081
    %v3083 = vrot.slane %v3082, 2
    %v3084 = vadd.f32 %v3082, %v3083
    %v3085 = vrot.slane %v3084, 1
    %v3086 = vadd.f32 %v3084, %v3085
    %v3087 = vadd.f32 %v2944, %v2945
    %v3088 = vadd.f32 %v3087, %v2946
    %v3089 = vadd.f32 %v3088, %v2947
    %v3090 = vadd.f32 %v3089, %v2948
    %v3091 = vadd.f32 %v3090, %v2949
    %v3092 = vadd.f32 %v3091, %v2950
    %v3093 = vadd.f32 %v3092, %v2951
    %v3094 = vadd.f32 %v3093, %v2952
    %v3095 = vadd.f32 %v3094, %v2953
    %v3096 = vadd.f32 %v3095, %v2954
    %v3097 = vadd.f32 %v3096, %v2955
    %v3098 = vadd.f32 %v3097, %v2956
    %v3099 = vadd.f32 %v3098, %v2957
    %v3100 = vadd.f32 %v3099, %v2958
    %v3101 = vadd.f32 %v3100, %v2959
    %v3102 = vrot.slane %v3101, 4
    %v3103 = vadd.f32 %v3101, %v3102
    %v3104 = vrot.slane %v3103, 2
    %v3105 = vadd.f32 %v3103, %v3104
    %v3106 = vrot.slane %v3105, 1
    %v3107 = vadd.f32 %v3105, %v3106
    %v3108 = vadd.f32 %v2960, %v2961
    %v3109 = vadd.f32 %v3108, %v2962
    %v3110 = vadd.f32 %v3109, %v2963
    %v3111 = vadd.f32 %v3110, %v2964
    %v3112 = vadd.f32 %v3111, %v2965
    %v3113 = vadd.f32 %v3112, %v2966
    %v3114 = vadd.f32 %v3113, %v2967
    %v3115 = vadd.f32 %v3114, %v2968
    %v3116 = vadd.f32 %v3115, %v2969
    %v3117 = vadd.f32 %v3116, %v2970
    %v3118 = vadd.f32 %v3117, %v2971
    %v3119 = vadd.f32 %v3118, %v2972
    %v3120 = vadd.f32 %v3119, %v2973
    %v3121 = vadd.f32 %v3120, %v2974
    %v3122 = vadd.f32 %v3121, %v2975
    %v3123 = vrot.slane %v3122, 4
    %v3124 = vadd.f32 %v3122, %v3123
    %v3125 = vrot.slane %v3124, 2
    %v3126 = vadd.f32 %v3124, %v3125
    %v3127 = vrot.slane %v3126, 1
    %v3128 = vadd.f32 %v3126, %v3127
    %v3129 = vadd.f32 %v2976, %v2977
    %v3130 = vadd.f32 %v3129, %v2978
    %v3131 = vadd.f32 %v3130, %v2979
    %v3132 = vadd.f32 %v3131, %v2980
    %v3133 = vadd.f32 %v3132, %v2981
    %v3134 = vadd.f32 %v3133, %v2982
    %v3135 = vadd.f32 %v3134, %v2983
    %v3136 = vadd.f32 %v3135, %v2984
    %v3137 = vadd.f32 %v3136, %v2985
    %v3138 = vadd.f32 %v3137, %v2986
    %v3139 = vadd.f32 %v3138, %v2987
    %v3140 = vadd.f32 %v3139, %v2988
    %v3141 = vadd.f32 %v3140, %v2989
    %v3142 = vadd.f32 %v3141, %v2990
    %v3143 = vadd.f32 %v3142, %v2991
    %v3144 = vrot.slane %v3143, 4
    %v3145 = vadd.f32 %v3143, %v3144
    %v3146 = vrot.slane %v3145, 2
    %v3147 = vadd.f32 %v3145, %v3146
    %v3148 = vrot.slane %v3147, 1
    %v3149 = vadd.f32 %v3147, %v3148
    %v3150 = vadd.f32 %v2992, %v2993
    %v3151 = vadd.f32 %v3150, %v2994
    %v3152 = vadd.f32 %v3151, %v2995
    %v3153 = vadd.f32 %v3152, %v2996
    %v3154 = vadd.f32 %v3153, %v2997
    %v3155 = vadd.f32 %v3154, %v2998
    %v3156 = vadd.f32 %v3155, %v2999
    %v3157 = vadd.f32 %v3156, %v3000
    %v3158 = vadd.f32 %v3157, %v3001
    %v3159 = vadd.f32 %v3158, %v3002
    %v3160 = vadd.f32 %v3159, %v3003
    %v3161 = vadd.f32 %v3160, %v3004
    %v3162 = vadd.f32 %v3161, %v3005
    %v3163 = vadd.f32 %v3162, %v3006
    %v3164 = vadd.f32 %v3163, %v3007
    %v3165 = vrot.slane %v3164, 4
    %v3166 = vadd.f32 %v3164, %v3165
    %v3167 = vrot.slane %v3166, 2
    %v3168 = vadd.f32 %v3166, %v3167
    %v3169 = vrot.slane %v3168, 1
    %v3170 = vadd.f32 %v3168, %v3169
    %v3171 = vadd.f32 %v3008, %v3009
    %v3172 = vadd.f32 %v3171, %v3010
    %v3173 = vadd.f32 %v3172, %v3011
    %v3174 = vadd.f32 %v3173, %v3012
    %v3175 = vadd.f32 %v3174, %v3013
    %v3176 = vadd.f32 %v3175, %v3014
    %v3177 = vadd.f32 %v3176, %v3015
    %v3178 = vadd.f32 %v3177, %v3016
    %v3179 = vadd.f32 %v3178, %v3017
    %v3180 = vadd.f32 %v3179, %v3018
    %v3181 = vadd.f32 %v3180, %v3019
    %v3182 = vadd.f32 %v3181, %v3020
    %v3183 = vadd.f32 %v3182, %v3021
    %v3184 = vadd.f32 %v3183, %v3022
    %v3185 = vadd.f32 %v3184, %v3023
    %v3186 = vrot.slane %v3185, 4
    %v3187 = vadd.f32 %v3185, %v3186
    %v3188 = vrot.slane %v3187, 2
    %v3189 = vadd.f32 %v3187, %v3188
    %v3190 = vrot.slane %v3189, 1
    %v3191 = vadd.f32 %v3189, %v3190
    %v3200 = vsel %vm2332, %v3065, %v3044
    %v3201 = vsel %vm2334, %v3086, %v3200
    %v3202 = vsel %vm2336, %v3107, %v3201
    %v3203 = vsel %vm2338, %v3128, %v3202
    %v3204 = vsel %vm2340, %v3149, %v3203
    %v3205 = vsel %vm2342, %v3170, %v3204
    %v3206 = vsel %vm2344, %v3191, %v3205
    %3208 = vst [vmem:[#allocation5] sm:$0xff] %v3206
    %3209 = vst [vmem:[#allocation6] sm:$0xff] %v2359
    // Predicated region
    $region22: #{tpu_custom_call.1} parent=1 // pred_check
      _
    $region23: #{tpu_custom_call.1} parent=1 // pred_check_branch
      %3211 = sbr.rel (0) target = $region25
    $region24: #{tpu_custom_call.1} parent=1 // pred_region
      %s3213 = ssub.s32 128, 128
      %3214 = vsyncadd [#allocation4], %s3213
      %s3216 = sshll.u32 [#allocation5], 4
      %s3217 = int_to_ptr.vmem [resolvable:$true] %s3216
      %3219 = dma.vmem_to_hbm [thread:$0]  %s3217, 128, %s4, [#allocation4]
    $region25: #{tpu_custom_call.1} parent=1 // pred_fallthru
      _
    // Predicated region
    $region26: #{tpu_custom_call.1} parent=1 // pred_check
      _
    $region27: #{tpu_custom_call.1} parent=1 // pred_check_branch
      %3221 = sbr.rel (0) target = $region29
    $region28: #{tpu_custom_call.1} parent=1 // pred_region
      %s3223 = ssub.s32 128, 128
      %3224 = vsyncadd [#allocation7], %s3223
      %s3226 = sshll.u32 [#allocation6], 4
      %s3227 = int_to_ptr.vmem [resolvable:$true] %s3226
      %3229 = dma.vmem_to_hbm [thread:$0]  %s3227, 128, %s5, [#allocation7]
    $region29: #{tpu_custom_call.1} parent=1 // pred_fallthru
      _
    // Predicated region
    $region30: #{tpu_custom_call.1} parent=1 // pred_check
      _
    $region31: #{tpu_custom_call.1} parent=1 // pred_check_branch
      %3231 = sbr.rel (0) target = $region33
    $region32: #{tpu_custom_call.1} parent=1 // pred_region
      %3232 = dma.done [#allocation4], 128
    $region33: #{tpu_custom_call.1} parent=1 // pred_fallthru
      _
    // Predicated region
    $region34: #{tpu_custom_call.1} parent=1 // pred_check
      _
    $region35: #{tpu_custom_call.1} parent=1 // pred_check_branch
      %3234 = sbr.rel (0) target = $region37
    $region36: #{tpu_custom_call.1} parent=1 // pred_region
      %3235 = dma.done [#allocation7], 128
    $region37: #{tpu_custom_call.1} parent=1 // pred_fallthru
      _
    %3236 = vsyncpa [#allocation3], 1
    %3237 = vsyncpa [#allocation4], 1
    %3238 = vsyncpa [#allocation7], 1

</llo_original>
